<compile_context>
chip_gen: v6e
topology: v6e:2x2x1
jax: 0.10.0
libtpu: 0.0.40
codegen_flags: <defaults>
</compile_context>

<pallas_src>
import functools

import numpy as np

import jax
import jax.numpy as jnp
from jax.experimental import pallas as pl
from jax.experimental.pallas import tpu as pltpu


# ----------------------------- in-kernel shift ------------------------------ #
def _shift_plus(buf_ref, cgp, W, *, row_lo, n_rows, mask_last, mask_first, grp):
    """'+' shift of ShiftConv2d1x1 (val=1.0) evaluated for buffer rows
    [row_lo, row_lo + n_rows) of a row-major flattened (C, n_buf_rows*W)
    VMEM buffer.  Channel groups (C == 5*cgp):
      g0: out[y,x] = in[y, x+1]   g1: in[y, x-1]
      g2: out[y,x] = in[y+1, x]   g3: in[y-1, x]    g4: identity
    Left/right image borders are zeroed via mask_first/mask_last; top/bottom
    borders are zeroed because the halo rows of `buf_ref` are zero there.
    """
    C = buf_ref.shape[0]
    n = n_rows * W
    lo = row_lo * W
    ml = mask_last[:, :n]     # (1, n): 0.0 where x == W-1 else 1.0
    mf = mask_first[:, :n]    # (1, n): 0.0 where x == 0   else 1.0

    def win(off, c0, c1):     # static windowed load from the shift buffer
        return buf_ref[c0:c1, lo + off:lo + off + n]

    if cgp % 8 == 0:
        # Sublane-aligned groups: compute each group's shift only on its own
        # channels and stitch along C (~5x less shift work than full-tensor
        # selects on every group).
        return jnp.concatenate([
            win(1, 0 * cgp, 1 * cgp) * ml,
            win(-1, 1 * cgp, 2 * cgp) * mf,
            win(W, 2 * cgp, 3 * cgp),
            win(-W, 3 * cgp, 4 * cgp),
            win(0, 4 * cgp, C),
        ], axis=0)

    # Unaligned groups: full-width windows + per-channel select against the
    # precomputed (C, 1) group-id vector (no iota / mod / div in-kernel).
    xp = win(1, 0, C) * ml
    xm = win(-1, 0, C) * mf
    yp = win(W, 0, C)
    ym = win(-W, 0, C)
    x0 = win(0, 0, C)
    return jnp.where(grp == 0, xp,
           jnp.where(grp == 1, xm,
           jnp.where(grp == 2, yp,
           jnp.where(grp == 3, ym, x0))))


# ------------------------------- fused kernel ------------------------------- #
def _mlp_kernel(ml_ref, mf_ref, gi_ref, gh_ref, x_ref, x_hbm_ref,
                w1_ref, b1_ref, w2_ref, b2_ref, o_ref,
                xbuf, hbuf, halo_prev, halo_next, sem, *,
                cgp_in, cgp_hid, W, tile_rows, n_tiles, approx_gelu):
    f32 = jnp.float32
    b = pl.program_id(0)
    t = pl.program_id(1)
    TH = tile_rows
    H = n_tiles * TH
    W2 = 2 * W
    Cin = xbuf.shape[0]
    Chid = hbuf.shape[0]

    # ---- kick off the tiny +-2-row halo DMAs (only needed when H is tiled) --
    if n_tiles > 1:
        prev_start = jnp.maximum(t * TH - 2, 0) * W          # clamped: DMA stays in-bounds
        next_start = jnp.minimum((t + 1) * TH, H - 2) * W
        cp_prev = pltpu.make_async_copy(
            x_hbm_ref.at[b, :, pl.ds(prev_start, W2)], halo_prev, sem.at[0])
        cp_next = pltpu.make_async_copy(
            x_hbm_ref.at[b, :, pl.ds(next_start, W2)], halo_next, sem.at[1])
        cp_prev.start()
        cp_next.start()

    # ---- assemble the f32 shift buffer: [2 halo rows | tile | 2 halo rows] --
    xbuf[:, W2:W2 + TH * W] = x_ref[...].astype(f32)
    if n_tiles > 1:
        cp_prev.wait()
        cp_next.wait()
        xbuf[:, 0:W2] = halo_prev[...].astype(f32)
        xbuf[:, W2 + TH * W:(TH + 4) * W] = halo_next[...].astype(f32)

    @pl.when(t == 0)                       # rows above the image: zero padding
    def _():
        xbuf[:, 0:W2] = jnp.zeros((Cin, W2), f32)

    @pl.when(t == n_tiles - 1)             # rows below the image: zero padding
    def _():
        xbuf[:, W2 + TH * W:(TH + 4) * W] = jnp.zeros((Cin, W2), f32)

    ml = ml_ref[...]
    mf = mf_ref[...]

    # ---- shift1 + fc1 + GELU (hidden needs tile_rows + 2 rows for shift2) ---
    xs = _shift_plus(xbuf, cgp_in, W, row_lo=1, n_rows=TH + 2,
                     mask_last=ml, mask_first=mf, grp=gi_ref[...])
    h = jnp.dot(w1_ref[...], xs.astype(w1_ref.dtype),
                preferred_element_type=f32)
    h = h + b1_ref[...]
    if approx_gelu:
        h = 0.5 * h * (1.0 + jnp.tanh(0.7978845608028654 * (h + 0.044715 * h * h * h)))
    else:  # exact erf GELU (matches torch.nn.GELU(approximate='none'))
        h = 0.5 * h * (1.0 + jax.lax.erf(h * 0.7071067811865476))
    hbuf[...] = h

    # hidden rows that fall outside the image must be zero for the 2nd shift
    @pl.when(t == 0)
    def _():
        hbuf[:, 0:W] = jnp.zeros((Chid, W), f32)

    @pl.when(t == n_tiles - 1)
    def _():
        hbuf[:, (TH + 1) * W:(TH + 2) * W] = jnp.zeros((Chid, W), f32)

    # ---- shift2 + fc2 -------------------------------------------------------
    hs = _shift_plus(hbuf, cgp_hid, W, row_lo=1, n_rows=TH,
                     mask_last=ml, mask_first=mf, grp=gh_ref[...])
    o = jnp.dot(w2_ref[...], hs.astype(w2_ref.dtype),
                preferred_element_type=f32)
    o = o + b2_ref[...]
    o_ref[...] = o.astype(o_ref.dtype)


# --------------------------- tiling / VMEM heuristics ------------------------ #
def _vmem_bytes_estimate(tile_rows, W, Cin, Chid, Cout, act_itemsize):
    px = tile_rows * W
    work = (Cin * (tile_rows + 4) * W          # xbuf (tile + halo)
            + 3 * Cin * (tile_rows + 2) * W    # shifted windows / xs
            + 3 * Chid * (tile_rows + 2) * W   # h / hbuf / hs
            + 2 * Cout * px) * 4               # fc2 accumulator + cast
    io = 2 * (Cin + Cout) * px * max(act_itemsize, 2)   # double-buffered blocks
    wts = 2 * (Chid * Cin + Cout * Chid) * act_itemsize + 8 * (Chid + Cout)
    return int(1.25 * (work + io)) + wts


def _pick_tile_rows(H, W, B, Cin, Chid, Cout, act_itemsize, vmem_cap):
    # Valid row tiles: divide H exactly and keep blocks lane-dense
    # (tile_rows*W % 128 == 0), with tile_rows == H always allowed.
    cands = sorted(th for th in range(1, H + 1)
                   if H % th == 0 and ((th * W) % 128 == 0 or th == H))
    budget = int(0.4 * vmem_cap)
    fits = [th for th in cands
            if _vmem_bytes_estimate(th, W, Cin, Chid, Cout, act_itemsize) <= budget]
    pool = fits if fits else cands[:1]
    target_px = 16384                      # amortize per-step overhead
    pick = pool[0]
    for th in pool:
        if th * W <= target_px:
            pick = th
    # v7x megacore: prefer >= 2 parallel grid steps when batch == 1.
    if B * (H // pick) < 2:
        smaller = [th for th in pool if th < pick] or [th for th in cands if th < pick]
        if smaller:
            pick = smaller[-1]
    return pick


# ------------------------------- JAX wrapper -------------------------------- #
def mlp_forward(x_nchw, w1, b1, w2, b2, *, compute_dtype=jnp.float32,
                out_dtype=None, tile_rows=None, approximate_gelu=False):
    """Mlp: ShiftConv2d1x1 -> GELU -> ShiftConv2d1x1.  NCHW in / NCHW out.

    w1:(hidden, Cin), w2:(Cout, hidden) (PyTorch conv weights, squeezed),
    b1:(hidden,), b2:(Cout,).
    """
    B, Cin, H, W = x_nchw.shape
    Chid = w1.shape[0]
    Cout = w2.shape[0]
    assert Cin % 5 == 0 and Chid % 5 == 0, "ShiftConv2d1x1 needs channels % 5 == 0"
    assert w1.shape == (Chid, Cin) and w2.shape == (Cout, Chid)
    HW = H * W
    out_dtype = x_nchw.dtype if out_dtype is None else out_dtype
    act_bytes = jnp.dtype(compute_dtype).itemsize

    # Generation-aware VMEM budget (64 MiB/TC on v7x, 128 MiB on v5e/v6e).
    try:
        vmem_cap = int(pltpu.get_tpu_info().vmem_capacity_bytes)
    except Exception:
        vmem_cap = 64 * 2**20

    if tile_rows is None:
        tile_rows = _pick_tile_rows(H, W, B, Cin, Chid, Cout, act_bytes, vmem_cap)
    assert H % tile_rows == 0, "tile_rows must divide H"
    assert (tile_rows * W) % 128 == 0 or tile_rows == H, \
        "tile_rows*W must be a multiple of 128 (lane-dense blocks) or tile_rows == H"
    TH = tile_rows
    n_tiles = H // TH

    # Free row-major reshape; optional bf16 cast halves HBM traffic of this
    # memory-bound kernel (elementwise work / accumulation stay f32 in-kernel).
    x_flat = x_nchw.reshape(B, Cin, HW).astype(compute_dtype)
    w1c = w1.astype(compute_dtype)
    w2c = w2.astype(compute_dtype)
    b1c = b1.reshape(Chid, 1).astype(jnp.float32)
    b2c = b2.reshape(Cout, 1).astype(jnp.float32)

    # Grid-invariant helpers (fetched to VMEM once, reused every grid step).
    col = np.arange((TH + 2) * W, dtype=np.int64) % W
    mask_last = jnp.asarray((col != W - 1).astype(np.float32)[None, :])
    mask_first = jnp.asarray((col != 0).astype(np.float32)[None, :])
    grp_in = jnp.asarray((np.arange(Cin) // (Cin // 5)).astype(np.int32)[:, None])
    grp_hid = jnp.asarray((np.arange(Chid) // (Chid // 5)).astype(np.int32)[:, None])

    est = _vmem_bytes_estimate(TH, W, Cin, Chid, Cout, act_bytes)
    vmem_limit = int(max(32 * 2**20,
                         min(int(1.5 * est) + (2 << 20), int(0.75 * vmem_cap))))

    kernel = functools.partial(
        _mlp_kernel, cgp_in=Cin // 5, cgp_hid=Chid // 5, W=W,
        tile_rows=TH, n_tiles=n_tiles, approx_gelu=approximate_gelu)

    grid_spec = pltpu.PrefetchScalarGridSpec(
        num_scalar_prefetch=0,
        grid=(B, n_tiles),
        in_specs=[
            pl.BlockSpec((1, (TH + 2) * W), lambda b, t: (0, 0)),      # mask_last
            pl.BlockSpec((1, (TH + 2) * W), lambda b, t: (0, 0)),      # mask_first
            pl.BlockSpec((Cin, 1), lambda b, t: (0, 0)),               # grp_in
            pl.BlockSpec((Chid, 1), lambda b, t: (0, 0)),              # grp_hid
            pl.BlockSpec((None, Cin, TH * W), lambda b, t: (b, 0, t)), # x main tile
            pl.BlockSpec(memory_space=pl.ANY),                         # x in HBM (halo DMA)
            pl.BlockSpec((Chid, Cin), lambda b, t: (0, 0)),            # w1
            pl.BlockSpec((Chid, 1), lambda b, t: (0, 0)),              # b1
            pl.BlockSpec((Cout, Chid), lambda b, t: (0, 0)),           # w2
            pl.BlockSpec((Cout, 1), lambda b, t: (0, 0)),              # b2
        ],
        out_specs=pl.BlockSpec((None, Cout, TH * W), lambda b, t: (b, 0, t)),
        scratch_shapes=[
            pltpu.VMEM((Cin, (TH + 4) * W), jnp.float32),    # xbuf (tile + halo)
            pltpu.VMEM((Chid, (TH + 2) * W), jnp.float32),   # hidden buffer
            pltpu.VMEM((Cin, 2 * W), compute_dtype),         # prev-halo landing
            pltpu.VMEM((Cin, 2 * W), compute_dtype),         # next-halo landing
            pltpu.SemaphoreType.DMA((2,)),
        ],
    )

    out_flat = pl.pallas_call(
        kernel,
        out_shape=jax.ShapeDtypeStruct((B, Cout, HW), out_dtype),
        grid_spec=grid_spec,
        compiler_params=pltpu.CompilerParams(
            dimension_semantics=("parallel", "parallel"),
            vmem_limit_bytes=vmem_limit),
    )(mask_last, mask_first, grp_in, grp_hid, x_flat, x_flat, w1c, b1c, w2c, b2c)

    return out_flat.reshape(B, Cout, H, W)   # free reshape back to NCHW


# ---------------------------- reference (pure JAX) --------------------------- #
def mlp_reference(x_nchw, w1, b1, w2, b2):
    def shift(x, cgp):   # NCHW, '+' mode, val=1.0, zero padding
        g0 = jnp.pad(x[:, 0 * cgp:1 * cgp, :, 1:], ((0, 0), (0, 0), (0, 0), (0, 1)))
        g1 = jnp.pad(x[:, 1 * cgp:2 * cgp, :, :-1], ((0, 0), (0, 0), (0, 0), (1, 0)))
        g2 = jnp.pad(x[:, 2 * cgp:3 * cgp, 1:, :], ((0, 0), (0, 0), (0, 1), (0, 0)))
        g3 = jnp.pad(x[:, 3 * cgp:4 * cgp, :-1, :], ((0, 0), (0, 0), (1, 0), (0, 0)))
        g4 = x[:, 4 * cgp:, :, :]
        return jnp.concatenate([g0, g1, g2, g3, g4], axis=1)

    Cin = x_nchw.shape[1]
    hidden = w1.shape[0]
    hi = jax.lax.Precision.HIGHEST
    xs = shift(x_nchw, Cin // 5)
    h = jnp.einsum('oc,bchw->bohw', w1, xs, precision=hi) + b1[None, :, None, None]
    h = jax.nn.gelu(h, approximate=False)
    hs = shift(h, hidden // 5)
    o = jnp.einsum('oc,bchw->bohw', w2, hs, precision=hi) + b2[None, :, None, None]
    return o


if __name__ == "__main__":
    # Small shapes consistent with the module (channels % 5 == 0).
    B, Cin, H, W = 2, 20, 16, 16
    hidden = 40      # hidden_features (also % 5 == 0, required by fc2's shift)
    Cout = Cin       # out_features defaults to in_features

    key = jax.random.PRNGKey(0)
    kx, kw1, kb1, kw2, kb2 = jax.random.split(key, 5)
    x = jax.random.normal(kx, (B, Cin, H, W), dtype=jnp.float32)
    w1 = jax.random.normal(kw1, (hidden, Cin), dtype=jnp.float32) * 0.05
    b1 = jax.random.normal(kb1, (hidden,), dtype=jnp.float32) * 0.05
    w2 = jax.random.normal(kw2, (Cout, hidden), dtype=jnp.float32) * 0.05
    b2 = jax.random.normal(kb2, (Cout,), dtype=jnp.float32) * 0.05

    ref = mlp_reference(x, w1, b1, w2, b2)

    # f32, auto-chosen row tile (single tile at this size).
    out = jax.block_until_ready(jax.jit(mlp_forward)(x, w1, b1, w2, b2))
    assert out.shape == (B, Cout, H, W), out.shape
    assert jnp.allclose(out, ref, atol=5e-4, rtol=5e-4), "f32 mismatch vs reference"

    # f32, forced 2 row-tiles per image: exercises the halo DMA / tile-boundary path.
    fwd_tiled = jax.jit(functools.partial(mlp_forward, tile_rows=8))
    out_t = jax.block_until_ready(fwd_tiled(x, w1, b1, w2, b2))
    assert jnp.allclose(out_t, ref, atol=5e-4, rtol=5e-4), "tiled f32 mismatch vs reference"

    # bf16 I/O + bf16 MXU operands (f32 accumulation, f32 elementwise), bf16 output.
    fwd_bf16 = jax.jit(functools.partial(mlp_forward, compute_dtype=jnp.bfloat16,
                                         out_dtype=jnp.bfloat16, tile_rows=8))
    out_bf16 = jax.block_until_ready(fwd_bf16(x, w1, b1, w2, b2))
    assert out_bf16.dtype == jnp.bfloat16
    assert jnp.allclose(out_bf16.astype(jnp.float32), ref, atol=3e-2, rtol=3e-2), \
        "bf16 mismatch vs reference"

    print("KERNEL_OK")
</pallas_src>

<mosaic_0001>
module attributes {stable_mosaic.version = 11 : i64} {
  func.func @_mlp_kernel(%arg0: i32, %arg1: i32, %arg2: memref<1x288xf32, #tpu.memory_space<vmem>>, %arg3: memref<1x288xf32, #tpu.memory_space<vmem>>, %arg4: memref<20x1xi32, #tpu.memory_space<vmem>>, %arg5: memref<40x1xi32, #tpu.memory_space<vmem>>, %arg6: memref<1x20x256xf32, #tpu.memory_space<vmem>>, %arg7: memref<2x20x256xf32, #tpu.memory_space<any>>, %arg8: memref<40x20xf32, #tpu.memory_space<vmem>>, %arg9: memref<40x1xf32, #tpu.memory_space<vmem>>, %arg10: memref<20x40xf32, #tpu.memory_space<vmem>>, %arg11: memref<20x1xf32, #tpu.memory_space<vmem>>, %arg12: memref<1x20x256xf32, #tpu.memory_space<vmem>>, %arg13: memref<20x320xf32, #tpu.memory_space<vmem>>, %arg14: memref<40x288xf32, #tpu.memory_space<vmem>>, %arg15: memref<20x32xf32, #tpu.memory_space<vmem>>, %arg16: memref<20x32xf32, #tpu.memory_space<vmem>>, %arg17: memref<2x!tpu.dma_semaphore, #tpu.memory_space<semaphore_mem>>) attributes {dimension_semantics = [#tpu.dimension_semantics<parallel>, #tpu.dimension_semantics<parallel>], iteration_bounds = array<i64: 2, 1>, scalar_prefetch = 0 : i64, scratch_operands = 5 : i64, tpu.core_type = #tpu.core_type<tc>, window_params = [{pipeline_mode = #tpu.pipeline_mode<synchronous>, transform_indices = @transform_0, window_bounds = array<i64: 1, 288>}, {pipeline_mode = #tpu.pipeline_mode<synchronous>, transform_indices = @transform_1, window_bounds = array<i64: 1, 288>}, {pipeline_mode = #tpu.pipeline_mode<synchronous>, transform_indices = @transform_2, window_bounds = array<i64: 20, 1>}, {pipeline_mode = #tpu.pipeline_mode<synchronous>, transform_indices = @transform_3, window_bounds = array<i64: 40, 1>}, {transform_indices = @transform_4, window_bounds = array<i64: 1, 20, 256>}, {}, {pipeline_mode = #tpu.pipeline_mode<synchronous>, transform_indices = @transform_6, window_bounds = array<i64: 40, 20>}, {pipeline_mode = #tpu.pipeline_mode<synchronous>, transform_indices = @transform_7, window_bounds = array<i64: 40, 1>}, {pipeline_mode = #tpu.pipeline_mode<synchronous>, transform_indices = @transform_8, window_bounds = array<i64: 20, 40>}, {pipeline_mode = #tpu.pipeline_mode<synchronous>, transform_indices = @transform_9, window_bounds = array<i64: 20, 1>}, {transform_indices = @transform_10, window_bounds = array<i64: 1, 20, 256>}]} {
    %c0 = arith.constant 0 : index
    %c0_0 = arith.constant 0 : index
    %c0_1 = arith.constant 0 : index
    %0 = vector.load %arg6[%c0, %c0_0, %c0_1] : memref<1x20x256xf32, #tpu.memory_space<vmem>>, vector<1x20x256xf32>
    %1 = vector.shape_cast %0 : vector<1x20x256xf32> to vector<20x256xf32>
    %c0_2 = arith.constant 0 : index
    %c32 = arith.constant 32 : index
    %2 = vector.load %arg13[%c0_2, %c32] : memref<20x320xf32, #tpu.memory_space<vmem>>, vector<20x256xf32>
    tpu.vector_store %arg13[%c0_2, %c32], %1 {strides = array<i32>} : memref<20x320xf32, #tpu.memory_space<vmem>>, vector<20x256xf32>,
    %c0_i32 = arith.constant 0 : i32
    %3 = arith.cmpi eq, %arg1, %c0_i32 : i32
    %4 = arith.extui %3 : i1 to i32
    %c0_i32_3 = arith.constant 0 : i32
    %5 = arith.cmpi ne, %4, %c0_i32_3 : i32
    scf.if %5 {
      %cst_49 = arith.constant 0.000000e+00 : f32
      %81 = vector.broadcast %cst_49 : f32 to vector<20x32xf32>
      %c0_50 = arith.constant 0 : index
      %c0_51 = arith.constant 0 : index
      %82 = vector.load %arg13[%c0_50, %c0_51] : memref<20x320xf32, #tpu.memory_space<vmem>>, vector<20x32xf32>
      tpu.vector_store %arg13[%c0_50, %c0_51], %81 {strides = array<i32>} : memref<20x320xf32, #tpu.memory_space<vmem>>, vector<20x32xf32>,
    } else {
    }
    %c0_i32_4 = arith.constant 0 : i32
    %6 = arith.cmpi eq, %arg1, %c0_i32_4 : i32
    %7 = arith.extui %6 : i1 to i32
    %c0_i32_5 = arith.constant 0 : i32
    %8 = arith.cmpi ne, %7, %c0_i32_5 : i32
    scf.if %8 {
      %cst_49 = arith.constant 0.000000e+00 : f32
      %81 = vector.broadcast %cst_49 : f32 to vector<20x32xf32>
      %c0_50 = arith.constant 0 : index
      %c288 = arith.constant 288 : index
      %82 = vector.load %arg13[%c0_50, %c288] : memref<20x320xf32, #tpu.memory_space<vmem>>, vector<20x32xf32>
      tpu.vector_store %arg13[%c0_50, %c288], %81 {strides = array<i32>} : memref<20x320xf32, #tpu.memory_space<vmem>>, vector<20x32xf32>,
    } else {
    }
    %c0_6 = arith.constant 0 : index
    %c0_7 = arith.constant 0 : index
    %9 = vector.load %arg2[%c0_6, %c0_7] : memref<1x288xf32, #tpu.memory_space<vmem>>, vector<1x288xf32>
    %c0_8 = arith.constant 0 : index
    %c0_9 = arith.constant 0 : index
    %10 = vector.load %arg3[%c0_8, %c0_9] : memref<1x288xf32, #tpu.memory_space<vmem>>, vector<1x288xf32>
    %c0_10 = arith.constant 0 : index
    %c0_11 = arith.constant 0 : index
    %11 = vector.load %arg4[%c0_10, %c0_11] : memref<20x1xi32, #tpu.memory_space<vmem>>, vector<20x1xi32>
    %c0_12 = arith.constant 0 : index
    %c17 = arith.constant 17 : index
    %12 = vector.load %arg13[%c0_12, %c17] : memref<20x320xf32, #tpu.memory_space<vmem>>, vector<20x288xf32>
    %13 = vector.broadcast %9 : vector<1x288xf32> to vector<20x288xf32>
    %14 = arith.mulf %12, %13 : vector<20x288xf32>
    %c0_13 = arith.constant 0 : index
    %c15 = arith.constant 15 : index
    %15 = vector.load %arg13[%c0_13, %c15] : memref<20x320xf32, #tpu.memory_space<vmem>>, vector<20x288xf32>
    %16 = vector.broadcast %10 : vector<1x288xf32> to vector<20x288xf32>
    %17 = arith.mulf %15, %16 : vector<20x288xf32>
    %c0_14 = arith.constant 0 : index
    %c32_15 = arith.constant 32 : index
    %18 = vector.load %arg13[%c0_14, %c32_15] : memref<20x320xf32, #tpu.memory_space<vmem>>, vector<20x288xf32>
    %c0_16 = arith.constant 0 : index
    %c0_17 = arith.constant 0 : index
    %19 = vector.load %arg13[%c0_16, %c0_17] : memref<20x320xf32, #tpu.memory_space<vmem>>, vector<20x288xf32>
    %c0_18 = arith.constant 0 : index
    %c16 = arith.constant 16 : index
    %20 = vector.load %arg13[%c0_18, %c16] : memref<20x320xf32, #tpu.memory_space<vmem>>, vector<20x288xf32>
    %c0_i32_19 = arith.constant 0 : i32
    %21 = vector.broadcast %c0_i32_19 : i32 to vector<20x1xi32>
    %22 = arith.cmpi eq, %11, %21 : vector<20x1xi32>
    %c1_i32 = arith.constant 1 : i32
    %23 = vector.broadcast %c1_i32 : i32 to vector<20x1xi32>
    %24 = arith.cmpi eq, %11, %23 : vector<20x1xi32>
    %c2_i32 = arith.constant 2 : i32
    %25 = vector.broadcast %c2_i32 : i32 to vector<20x1xi32>
    %26 = arith.cmpi eq, %11, %25 : vector<20x1xi32>
    %c3_i32 = arith.constant 3 : i32
    %27 = vector.broadcast %c3_i32 : i32 to vector<20x1xi32>
    %28 = arith.cmpi eq, %11, %27 : vector<20x1xi32>
    %29 = vector.shape_cast %28 : vector<20x1xi1> to vector<20x1xi1>
    %30 = vector.broadcast %29 : vector<20x1xi1> to vector<20x288xi1>
    %31 = arith.select %30, %19, %20 : vector<20x288xi1>, vector<20x288xf32>
    %32 = vector.shape_cast %26 : vector<20x1xi1> to vector<20x1xi1>
    %33 = vector.broadcast %32 : vector<20x1xi1> to vector<20x288xi1>
    %34 = arith.select %33, %18, %31 : vector<20x288xi1>, vector<20x288xf32>
    %35 = vector.shape_cast %24 : vector<20x1xi1> to vector<20x1xi1>
    %36 = vector.broadcast %35 : vector<20x1xi1> to vector<20x288xi1>
    %37 = arith.select %36, %17, %34 : vector<20x288xi1>, vector<20x288xf32>
    %38 = vector.shape_cast %22 : vector<20x1xi1> to vector<20x1xi1>
    %39 = vector.broadcast %38 : vector<20x1xi1> to vector<20x288xi1>
    %40 = arith.select %39, %14, %37 : vector<20x288xi1>, vector<20x288xf32>
    %c0_20 = arith.constant 0 : index
    %c0_21 = arith.constant 0 : index
    %41 = vector.load %arg8[%c0_20, %c0_21] : memref<40x20xf32, #tpu.memory_space<vmem>>, vector<40x20xf32>
    %cst = arith.constant dense<0.000000e+00> : vector<40x288xf32>
    %42 = tpu.matmul %41, %40, %cst {dimension_numbers = #tpu.dot_dimension_numbers<[1], [0], [0], [1], [0, 0, 1, 1], [], []>} : vector<40x20xf32>, vector<20x288xf32>, vector<40x288xf32> -> vector<40x288xf32>
    %c0_22 = arith.constant 0 : index
    %c0_23 = arith.constant 0 : index
    %43 = vector.load %arg9[%c0_22, %c0_23] : memref<40x1xf32, #tpu.memory_space<vmem>>, vector<40x1xf32>
    %44 = vector.broadcast %43 : vector<40x1xf32> to vector<40x288xf32>
    %45 = arith.addf %42, %44 : vector<40x288xf32>
    %cst_24 = arith.constant 5.000000e-01 : f32
    %46 = vector.broadcast %cst_24 : f32 to vector<40x288xf32>
    %47 = arith.mulf %46, %45 : vector<40x288xf32>
    %cst_25 = arith.constant 0.707106769 : f32
    %48 = vector.broadcast %cst_25 : f32 to vector<40x288xf32>
    %49 = arith.mulf %45, %48 : vector<40x288xf32>
    %50 = math.erf %49 : vector<40x288xf32>
    %cst_26 = arith.constant 1.000000e+00 : f32
    %51 = vector.broadcast %cst_26 : f32 to vector<40x288xf32>
    %52 = arith.addf %51, %50 : vector<40x288xf32>
    %53 = arith.mulf %47, %52 : vector<40x288xf32>
    %c0_27 = arith.constant 0 : index
    %c0_28 = arith.constant 0 : index
    %54 = vector.load %arg14[%c0_27, %c0_28] : memref<40x288xf32, #tpu.memory_space<vmem>>, vector<40x288xf32>
    tpu.vector_store %arg14[%c0_27, %c0_28], %53 {strides = array<i32>} : memref<40x288xf32, #tpu.memory_space<vmem>>, vector<40x288xf32>,
    %c0_i32_29 = arith.constant 0 : i32
    %55 = arith.cmpi eq, %arg1, %c0_i32_29 : i32
    %56 = arith.extui %55 : i1 to i32
    %c0_i32_30 = arith.constant 0 : i32
    %57 = arith.cmpi ne, %56, %c0_i32_30 : i32
    scf.if %57 {
      %cst_49 = arith.constant 0.000000e+00 : f32
      %81 = vector.broadcast %cst_49 : f32 to vector<40x16xf32>
      %c0_50 = arith.constant 0 : index
      %c0_51 = arith.constant 0 : index
      %82 = vector.load %arg14[%c0_50, %c0_51] : memref<40x288xf32, #tpu.memory_space<vmem>>, vector<40x16xf32>
      tpu.vector_store %arg14[%c0_50, %c0_51], %81 {strides = array<i32>} : memref<40x288xf32, #tpu.memory_space<vmem>>, vector<40x16xf32>,
    } else {
    }
    %c0_i32_31 = arith.constant 0 : i32
    %58 = arith.cmpi eq, %arg1, %c0_i32_31 : i32
    %59 = arith.extui %58 : i1 to i32
    %c0_i32_32 = arith.constant 0 : i32
    %60 = arith.cmpi ne, %59, %c0_i32_32 : i32
    scf.if %60 {
      %cst_49 = arith.constant 0.000000e+00 : f32
      %81 = vector.broadcast %cst_49 : f32 to vector<40x16xf32>
      %c0_50 = arith.constant 0 : index
      %c272 = arith.constant 272 : index
      %82 = vector.load %arg14[%c0_50, %c272] : memref<40x288xf32, #tpu.memory_space<vmem>>, vector<40x16xf32>
      tpu.vector_store %arg14[%c0_50, %c272], %81 {strides = array<i32>} : memref<40x288xf32, #tpu.memory_space<vmem>>, vector<40x16xf32>,
    } else {
    }
    %61 = vector.extract_strided_slice %9 {offsets = [0, 0], sizes = [1, 256], strides = [1, 1]} : vector<1x288xf32> to vector<1x256xf32>
    %62 = vector.extract_strided_slice %10 {offsets = [0, 0], sizes = [1, 256], strides = [1, 1]} : vector<1x288xf32> to vector<1x256xf32>
    %c0_33 = arith.constant 0 : index
    %c17_34 = arith.constant 17 : index
    %63 = vector.load %arg14[%c0_33, %c17_34] : memref<40x288xf32, #tpu.memory_space<vmem>>, vector<8x256xf32>
    %64 = vector.broadcast %61 : vector<1x256xf32> to vector<8x256xf32>
    %65 = arith.mulf %63, %64 : vector<8x256xf32>
    %c8 = arith.constant 8 : index
    %c15_35 = arith.constant 15 : index
    %66 = vector.load %arg14[%c8, %c15_35] : memref<40x288xf32, #tpu.memory_space<vmem>>, vector<8x256xf32>
    %67 = vector.broadcast %62 : vector<1x256xf32> to vector<8x256xf32>
    %68 = arith.mulf %66, %67 : vector<8x256xf32>
    %c16_36 = arith.constant 16 : index
    %c32_37 = arith.constant 32 : index
    %69 = vector.load %arg14[%c16_36, %c32_37] : memref<40x288xf32, #tpu.memory_space<vmem>>, vector<8x256xf32>
    %c24 = arith.constant 24 : index
    %c0_38 = arith.constant 0 : index
    %70 = vector.load %arg14[%c24, %c0_38] : memref<40x288xf32, #tpu.memory_space<vmem>>, vector<8x256xf32>
    %c32_39 = arith.constant 32 : index
    %c16_40 = arith.constant 16 : index
    %71 = vector.load %arg14[%c32_39, %c16_40] : memref<40x288xf32, #tpu.memory_space<vmem>>, vector<8x256xf32>
    %72 = tpu.concatenate %65, %68, %69, %70, %71 in 0 : vector<8x256xf32>, vector<8x256xf32>, vector<8x256xf32>, vector<8x256xf32>, vector<8x256xf32> -> vector<40x256xf32>
    %c0_41 = arith.constant 0 : index
    %c0_42 = arith.constant 0 : index
    %73 = vector.load %arg10[%c0_41, %c0_42] : memref<20x40xf32, #tpu.memory_space<vmem>>, vector<20x40xf32>
    %cst_43 = arith.constant dense<0.000000e+00> : vector<20x256xf32>
    %74 = tpu.matmul %73, %72, %cst_43 {dimension_numbers = #tpu.dot_dimension_numbers<[1], [0], [0], [1], [0, 0, 1, 1], [], []>} : vector<20x40xf32>, vector<40x256xf32>, vector<20x256xf32> -> vector<20x256xf32>
    %c0_44 = arith.constant 0 : index
    %c0_45 = arith.constant 0 : index
    %75 = vector.load %arg11[%c0_44, %c0_45] : memref<20x1xf32, #tpu.memory_space<vmem>>, vector<20x1xf32>
    %76 = vector.broadcast %75 : vector<20x1xf32> to vector<20x256xf32>
    %77 = arith.addf %74, %76 : vector<20x256xf32>
    %c0_46 = arith.constant 0 : index
    %c0_47 = arith.constant 0 : index
    %c0_48 = arith.constant 0 : index
    %78 = vector.load %arg12[%c0_46, %c0_47, %c0_48] : memref<1x20x256xf32, #tpu.memory_space<vmem>>, vector<1x20x256xf32>
    %79 = vector.shape_cast %78 : vector<1x20x256xf32> to vector<20x256xf32>
    %80 = vector.shape_cast %77 : vector<20x256xf32> to vector<1x20x256xf32>
    tpu.vector_store %arg12[%c0_46, %c0_47, %c0_48], %80 {strides = array<i32>} : memref<1x20x256xf32, #tpu.memory_space<vmem>>, vector<1x20x256xf32>,
    return
  }
  func.func @transform_0(%arg0: i32, %arg1: i32) -> (i32, i32) {
    %c0_i32 = arith.constant 0 : i32
    %c0_i32_0 = arith.constant 0 : i32
    %c0_i32_1 = arith.constant 0 : i32
    return %c0_i32, %c0_i32_0 : i32, i32
  }
  func.func @transform_1(%arg0: i32, %arg1: i32) -> (i32, i32) {
    %c0_i32 = arith.constant 0 : i32
    %c0_i32_0 = arith.constant 0 : i32
    %c0_i32_1 = arith.constant 0 : i32
    return %c0_i32, %c0_i32_0 : i32, i32
  }
  func.func @transform_2(%arg0: i32, %arg1: i32) -> (i32, i32) {
    %c0_i32 = arith.constant 0 : i32
    %c0_i32_0 = arith.constant 0 : i32
    %c0_i32_1 = arith.constant 0 : i32
    return %c0_i32, %c0_i32_0 : i32, i32
  }
  func.func @transform_3(%arg0: i32, %arg1: i32) -> (i32, i32) {
    %c0_i32 = arith.constant 0 : i32
    %c0_i32_0 = arith.constant 0 : i32
    %c0_i32_1 = arith.constant 0 : i32
    return %c0_i32, %c0_i32_0 : i32, i32
  }
  func.func @transform_4(%arg0: i32, %arg1: i32) -> (i32, i32, i32) {
    %c0_i32 = arith.constant 0 : i32
    %c0_i32_0 = arith.constant 0 : i32
    return %arg0, %c0_i32, %arg1 : i32, i32, i32
  }
  func.func @transform_6(%arg0: i32, %arg1: i32) -> (i32, i32) {
    %c0_i32 = arith.constant 0 : i32
    %c0_i32_0 = arith.constant 0 : i32
    %c0_i32_1 = arith.constant 0 : i32
    return %c0_i32, %c0_i32_0 : i32, i32
  }
  func.func @transform_7(%arg0: i32, %arg1: i32) -> (i32, i32) {
    %c0_i32 = arith.constant 0 : i32
    %c0_i32_0 = arith.constant 0 : i32
    %c0_i32_1 = arith.constant 0 : i32
    return %c0_i32, %c0_i32_0 : i32, i32
  }
  func.func @transform_8(%arg0: i32, %arg1: i32) -> (i32, i32) {
    %c0_i32 = arith.constant 0 : i32
    %c0_i32_0 = arith.constant 0 : i32
    %c0_i32_1 = arith.constant 0 : i32
    return %c0_i32, %c0_i32_0 : i32, i32
  }
  func.func @transform_9(%arg0: i32, %arg1: i32) -> (i32, i32) {
    %c0_i32 = arith.constant 0 : i32
    %c0_i32_0 = arith.constant 0 : i32
    %c0_i32_1 = arith.constant 0 : i32
    return %c0_i32, %c0_i32_0 : i32, i32
  }
  func.func @transform_10(%arg0: i32, %arg1: i32) -> (i32, i32, i32) {
    %c0_i32 = arith.constant 0 : i32
    %c0_i32_0 = arith.constant 0 : i32
    return %arg0, %c0_i32, %arg1 : i32, i32, i32
  }
}

</mosaic_0001>

<llo_original>
// kernel: mlp_forward.1
$region0: #{mlp_forward.1}
  #allocation0 [shape = 'u32[]', space=smem, size = 0x4, offset = 0x4, fixed_abs, tag = 'smem constant byte address 0x4 - core index']
  #allocation1 [shape = 'u32[144,128]{1,0:T(1,128)}', space=vmem, size = 0x12000, scoped, tag = 'internal scratch']
  #allocation2 [shape = 'f32[20,320]{1,0:T(8,128)}', space=vmem, size = 0x9000, scoped, tag = 'scratch operand']
  #allocation3 [shape = 'f32[40,288]{1,0:T(8,128)}', space=vmem, size = 0xf000, scoped, tag = 'scratch operand']
  #allocation4 [shape = 'f32[20,32]{1,0:T(8,128)}', space=vmem, size = 0x3000, scoped, tag = 'scratch operand']
  #allocation5 [shape = 'f32[20,32]{1,0:T(8,128)}', space=vmem, size = 0x3000, scoped, tag = 'scratch operand']
  #allocation6 [shape = 's32[2]{0}', space=sflag, size = 0x8, scoped, tag = 'scratch operand']
  %s0 = inlined_call_operand.vmem [shape: f32[1,288], index: 0, kind: input, shape index: {}]
  %s1 = inlined_call_operand.vmem [shape: f32[1,288], index: 1, kind: input, shape index: {}]
  %s2 = inlined_call_operand.vmem [shape: s32[20,1], index: 2, kind: input, shape index: {}]
  %s3 = inlined_call_operand.vmem [shape: s32[40,1], index: 3, kind: input, shape index: {}]
  %s4 = inlined_call_operand.vmem [shape: f32[2,20,256], index: 4, kind: input, shape index: {}, may-alias: {4,5}]
  %s5 = inlined_call_operand.vmem [shape: f32[2,20,256], index: 5, kind: input, shape index: {}, may-alias: {4,5}]
  %s6 = inlined_call_operand.vmem [shape: f32[40,20], index: 6, kind: input, shape index: {}]
  %s7 = inlined_call_operand.vmem [shape: f32[40,1], index: 7, kind: input, shape index: {}]
  %s8 = inlined_call_operand.vmem [shape: f32[20,40], index: 8, kind: input, shape index: {}]
  %s9 = inlined_call_operand.vmem [shape: f32[20,1], index: 9, kind: input, shape index: {}]
  %s10 = inlined_call_operand.vmem [shape: f32[2,20,256], index: 10, kind: output, shape index: {}]
  %s11 = sld [smem:[#allocation0]]
  $region77: #{mlp_forward.1} parent=0
    _
  %s13 = ssub.s32 1, %s11
  %s14 = scalar_select 0, %s13, %s11
  loop: start=0, step=1, limit=4
  $region2: #{mlp_forward.1} parent=0 // loop_pre_header
    _
  $region3: #{mlp_forward.1} parent=0 // loop_header
    %s16 = sphi 0, %s20
    %p17 = scmp.ge.s32.totalorder %s16, 4
    %s23 = sphi 0, %s35
    %s24 = sphi 0, %s31
    %s25 = sphi 0, %s23
    %s26 = sphi 0, %s24
    %s27 = sphi 0, %s25
    %s28 = sphi 0, %s26
    %s36 = sphi 0, %s36
    %s38 = sphi 0, %s36
    %s39 = sphi 0, %s38
    %s53 = sphi 0, %s39
    %s57 = sphi 0, %s57
    %s59 = sphi 0, %s57
    %s60 = sphi 0, %s59
    %s74 = sphi 0, %s60
    %s78 = sphi 0, %s78
    %s80 = sphi 0, %s78
    %s81 = sphi 0, %s80
    %s95 = sphi 0, %s81
    %s99 = sphi 0, %s99
    %s101 = sphi 0, %s99
    %s102 = sphi 0, %s101
    %s116 = sphi 0, %s102
    %s124 = sphi 0, %s126
    %s127 = sphi 0, %s124
    %s128 = sphi 0, %s127
    %s144 = sphi 0, %s128
    %s148 = sphi 0, %s148
    %s150 = sphi 0, %s148
    %s151 = sphi 0, %s150
    %s165 = sphi 0, %s151
    %s169 = sphi 0, %s169
    %s171 = sphi 0, %s169
    %s172 = sphi 0, %s171
    %s186 = sphi 0, %s172
    %s190 = sphi 0, %s190
    %s192 = sphi 0, %s190
    %s193 = sphi 0, %s192
    %s207 = sphi 0, %s193
    %s211 = sphi 0, %s211
    %s213 = sphi 0, %s211
    %s214 = sphi 0, %s213
    %s228 = sphi 0, %s214
    %s236 = sphi 0, %s238
    %s239 = sphi 0, %s236
    %s240 = sphi 0, %s239
    %s256 = sphi 0, %s240
  $region4: #{mlp_forward.1} parent=0 // loop_header_branch
    %19 = sbr.rel (%p17) target = $region8
  $region5: #{mlp_forward.1} parent=0 // loop_body
    %s21 = ssub.s32 %s16, 1
    %s22 = ssub.s32 %s16, 2
    %s29 = sadd.s32 1, %s24
    %p30 = scmp.ge.s32.totalorder %s29, 1
    %s31 = scalar_select %p30, 0, %s29
    %s32 = sadd.s32 1, %s23
    %s33 = scalar_select %p30, %s32, %s23
    %p34 = scmp.ge.s32.totalorder %s33, 2
    %s35 = scalar_select %p34, 0, %s33
    %s37 = sadd.s32 %s36, 1
    %p40 = scmp.eq.s32.totalorder %s16, 1
    %p41 = scmp.ne.s32.totalorder %s36, %s38
    %p42 = scmp.eq.s32.totalorder %s16, 0
    %p43 = por %p41, %p42
    %p44 = scmp.ne.s32.totalorder %s36, %s38
    %p45 = scmp.eq.s32.totalorder %s21, 1
    %p46 = por %p44, %p45
    %p47 = scmp.ne.s32.totalorder %s38, %s39
    %p48 = scmp.eq.s32.totalorder %s21, 0
    %p49 = por %p47, %p48
    %p50 = scmp.ne.s32.totalorder %s38, %s39
    %p51 = scmp.eq.s32.totalorder %s22, 1
    %p52 = por %p50, %p51
    %p54 = scmp.ne.s32.totalorder %s39, %s53
    %p55 = scmp.eq.s32.totalorder %s22, 0
    %p56 = por %p54, %p55
    %s58 = sadd.s32 %s57, 1
    %p61 = scmp.eq.s32.totalorder %s16, 1
    %p62 = scmp.ne.s32.totalorder %s57, %s59
    %p63 = scmp.eq.s32.totalorder %s16, 0
    %p64 = por %p62, %p63
    %p65 = scmp.ne.s32.totalorder %s57, %s59
    %p66 = scmp.eq.s32.totalorder %s21, 1
    %p67 = por %p65, %p66
    %p68 = scmp.ne.s32.totalorder %s59, %s60
    %p69 = scmp.eq.s32.totalorder %s21, 0
    %p70 = por %p68, %p69
    %p71 = scmp.ne.s32.totalorder %s59, %s60
    %p72 = scmp.eq.s32.totalorder %s22, 1
    %p73 = por %p71, %p72
    %p75 = scmp.ne.s32.totalorder %s60, %s74
    %p76 = scmp.eq.s32.totalorder %s22, 0
    %p77 = por %p75, %p76
    %s79 = sadd.s32 %s78, 1
    %p82 = scmp.eq.s32.totalorder %s16, 1
    %p83 = scmp.ne.s32.totalorder %s78, %s80
    %p84 = scmp.eq.s32.totalorder %s16, 0
    %p85 = por %p83, %p84
    %p86 = scmp.ne.s32.totalorder %s78, %s80
    %p87 = scmp.eq.s32.totalorder %s21, 1
    %p88 = por %p86, %p87
    %p89 = scmp.ne.s32.totalorder %s80, %s81
    %p90 = scmp.eq.s32.totalorder %s21, 0
    %p91 = por %p89, %p90
    %p92 = scmp.ne.s32.totalorder %s80, %s81
    %p93 = scmp.eq.s32.totalorder %s22, 1
    %p94 = por %p92, %p93
    %p96 = scmp.ne.s32.totalorder %s81, %s95
    %p97 = scmp.eq.s32.totalorder %s22, 0
    %p98 = por %p96, %p97
    %s100 = sadd.s32 %s99, 1
    %p103 = scmp.eq.s32.totalorder %s16, 1
    %p104 = scmp.ne.s32.totalorder %s99, %s101
    %p105 = scmp.eq.s32.totalorder %s16, 0
    %p106 = por %p104, %p105
    %p107 = scmp.ne.s32.totalorder %s99, %s101
    %p108 = scmp.eq.s32.totalorder %s21, 1
    %p109 = por %p107, %p108
    %p110 = scmp.ne.s32.totalorder %s101, %s102
    %p111 = scmp.eq.s32.totalorder %s21, 0
    %p112 = por %p110, %p111
    %p113 = scmp.ne.s32.totalorder %s101, %s102
    %p114 = scmp.eq.s32.totalorder %s22, 1
    %p115 = por %p113, %p114
    %p117 = scmp.ne.s32.totalorder %s102, %s116
    %p118 = scmp.eq.s32.totalorder %s22, 0
    %p119 = por %p117, %p118
    %s120 = ssub.s32 %s23, %s35
    %s121 = ssub.s32 %s24, %s31
    %s122 = sor.u32 %s120, %s121
    %p123 = scmp.eq.s32.totalorder %s122, 0
    %s125 = sadd.s32 %s124, 1
    %s126 = scalar_select %p123, %s124, %s125
    %p129 = pneg %p123
    %p130 = scmp.eq.s32.totalorder %s16, 1
    %p131 = por %p129, %p130
    %p132 = scmp.ne.s32.totalorder %s124, %s127
    %p133 = scmp.eq.s32.totalorder %s16, 0
    %p134 = por %p132, %p133
    %p135 = scmp.ne.s32.totalorder %s124, %s127
    %p136 = scmp.eq.s32.totalorder %s21, 1
    %p137 = por %p135, %p136
    %p138 = scmp.ne.s32.totalorder %s127, %s128
    %p139 = scmp.eq.s32.totalorder %s21, 0
    %p140 = por %p138, %p139
    %p141 = scmp.ne.s32.totalorder %s127, %s128
    %p142 = scmp.eq.s32.totalorder %s22, 1
    %p143 = por %p141, %p142
    %p145 = scmp.ne.s32.totalorder %s128, %s144
    %p146 = scmp.eq.s32.totalorder %s22, 0
    %p147 = por %p145, %p146
    %s149 = sadd.s32 %s148, 1
    %p152 = scmp.eq.s32.totalorder %s16, 1
    %p153 = scmp.ne.s32.totalorder %s148, %s150
    %p154 = scmp.eq.s32.totalorder %s16, 0
    %p155 = por %p153, %p154
    %p156 = scmp.ne.s32.totalorder %s148, %s150
    %p157 = scmp.eq.s32.totalorder %s21, 1
    %p158 = por %p156, %p157
    %p159 = scmp.ne.s32.totalorder %s150, %s151
    %p160 = scmp.eq.s32.totalorder %s21, 0
    %p161 = por %p159, %p160
    %p162 = scmp.ne.s32.totalorder %s150, %s151
    %p163 = scmp.eq.s32.totalorder %s22, 1
    %p164 = por %p162, %p163
    %p166 = scmp.ne.s32.totalorder %s151, %s165
    %p167 = scmp.eq.s32.totalorder %s22, 0
    %p168 = por %p166, %p167
    %s170 = sadd.s32 %s169, 1
    %p173 = scmp.eq.s32.totalorder %s16, 1
    %p174 = scmp.ne.s32.totalorder %s169, %s171
    %p175 = scmp.eq.s32.totalorder %s16, 0
    %p176 = por %p174, %p175
    %p177 = scmp.ne.s32.totalorder %s169, %s171
    %p178 = scmp.eq.s32.totalorder %s21, 1
    %p179 = por %p177, %p178
    %p180 = scmp.ne.s32.totalorder %s171, %s172
    %p181 = scmp.eq.s32.totalorder %s21, 0
    %p182 = por %p180, %p181
    %p183 = scmp.ne.s32.totalorder %s171, %s172
    %p184 = scmp.eq.s32.totalorder %s22, 1
    %p185 = por %p183, %p184
    %p187 = scmp.ne.s32.totalorder %s172, %s186
    %p188 = scmp.eq.s32.totalorder %s22, 0
    %p189 = por %p187, %p188
    %s191 = sadd.s32 %s190, 1
    %p194 = scmp.eq.s32.totalorder %s16, 1
    %p195 = scmp.ne.s32.totalorder %s190, %s192
    %p196 = scmp.eq.s32.totalorder %s16, 0
    %p197 = por %p195, %p196
    %p198 = scmp.ne.s32.totalorder %s190, %s192
    %p199 = scmp.eq.s32.totalorder %s21, 1
    %p200 = por %p198, %p199
    %p201 = scmp.ne.s32.totalorder %s192, %s193
    %p202 = scmp.eq.s32.totalorder %s21, 0
    %p203 = por %p201, %p202
    %p204 = scmp.ne.s32.totalorder %s192, %s193
    %p205 = scmp.eq.s32.totalorder %s22, 1
    %p206 = por %p204, %p205
    %p208 = scmp.ne.s32.totalorder %s193, %s207
    %p209 = scmp.eq.s32.totalorder %s22, 0
    %p210 = por %p208, %p209
    %s212 = sadd.s32 %s211, 1
    %p215 = scmp.eq.s32.totalorder %s16, 1
    %p216 = scmp.ne.s32.totalorder %s211, %s213
    %p217 = scmp.eq.s32.totalorder %s16, 0
    %p218 = por %p216, %p217
    %p219 = scmp.ne.s32.totalorder %s211, %s213
    %p220 = scmp.eq.s32.totalorder %s21, 1
    %p221 = por %p219, %p220
    %p222 = scmp.ne.s32.totalorder %s213, %s214
    %p223 = scmp.eq.s32.totalorder %s21, 0
    %p224 = por %p222, %p223
    %p225 = scmp.ne.s32.totalorder %s213, %s214
    %p226 = scmp.eq.s32.totalorder %s22, 1
    %p227 = por %p225, %p226
    %p229 = scmp.ne.s32.totalorder %s214, %s228
    %p230 = scmp.eq.s32.totalorder %s22, 0
    %p231 = por %p229, %p230
    %s232 = ssub.s32 %s23, %s35
    %s233 = ssub.s32 %s24, %s31
    %s234 = sor.u32 %s232, %s233
    %p235 = scmp.eq.s32.totalorder %s234, 0
    %s237 = sadd.s32 %s236, 1
    %s238 = scalar_select %p235, %s236, %s237
    %p241 = pneg %p235
    %p242 = scmp.eq.s32.totalorder %s16, 1
    %p243 = por %p241, %p242
    %p244 = scmp.ne.s32.totalorder %s236, %s239
    %p245 = scmp.eq.s32.totalorder %s16, 0
    %p246 = por %p244, %p245
    %p247 = scmp.ne.s32.totalorder %s236, %s239
    %p248 = scmp.eq.s32.totalorder %s21, 1
    %p249 = por %p247, %p248
    %p250 = scmp.ne.s32.totalorder %s239, %s240
    %p251 = scmp.eq.s32.totalorder %s21, 0
    %p252 = por %p250, %p251
    %p253 = scmp.ne.s32.totalorder %s239, %s240
    %p254 = scmp.eq.s32.totalorder %s22, 1
    %p255 = por %p253, %p254
    %p257 = scmp.ne.s32.totalorder %s240, %s256
    %p258 = scmp.eq.s32.totalorder %s22, 0
    %p259 = por %p257, %p258
    %p260 = scmp.le.s32.totalorder 1, %s16
    %p261 = scmp.lt.s32.totalorder %s16, 3
    %p262 = pnand %p260, %p261
    %p263 = pneg %p262
    // Predicated region
    $region9: #{mlp_forward.1} parent=5 // pred_check
      _
    $region10: #{mlp_forward.1} parent=5 // pred_check_branch
      %265 = sbr.rel (%p262) target = $region12
    $region11: #{mlp_forward.1} parent=5 // pred_region
      %s266 = ssub.s32 %s16, 1
      // Predicated region
      $region13: #{mlp_forward.1} parent=11 // pred_check
        %p267 = pneg %p49
      $region14: #{mlp_forward.1} parent=11 // pred_check_branch
        %269 = sbr.rel (%p267) target = $region16
      $region15: #{mlp_forward.1} parent=11 // pred_region
        _
      $region16: #{mlp_forward.1} parent=11 // pred_fallthru
        _
      // Predicated region
      $region17: #{mlp_forward.1} parent=11 // pred_check
        %p270 = pneg %p70
      $region18: #{mlp_forward.1} parent=11 // pred_check_branch
        %272 = sbr.rel (%p270) target = $region20
      $region19: #{mlp_forward.1} parent=11 // pred_region
        _
      $region20: #{mlp_forward.1} parent=11 // pred_fallthru
        _
      // Predicated region
      $region21: #{mlp_forward.1} parent=11 // pred_check
        %p273 = pneg %p91
      $region22: #{mlp_forward.1} parent=11 // pred_check_branch
        %275 = sbr.rel (%p273) target = $region24
      $region23: #{mlp_forward.1} parent=11 // pred_region
        _
      $region24: #{mlp_forward.1} parent=11 // pred_fallthru
        _
      // Predicated region
      $region25: #{mlp_forward.1} parent=11 // pred_check
        %p276 = pneg %p112
      $region26: #{mlp_forward.1} parent=11 // pred_check_branch
        %278 = sbr.rel (%p276) target = $region28
      $region27: #{mlp_forward.1} parent=11 // pred_region
        _
      $region28: #{mlp_forward.1} parent=11 // pred_fallthru
        _
      // Predicated region
      $region29: #{mlp_forward.1} parent=11 // pred_check
        %p279 = pneg %p161
      $region30: #{mlp_forward.1} parent=11 // pred_check_branch
        %281 = sbr.rel (%p279) target = $region32
      $region31: #{mlp_forward.1} parent=11 // pred_region
        _
      $region32: #{mlp_forward.1} parent=11 // pred_fallthru
        _
      // Predicated region
      $region33: #{mlp_forward.1} parent=11 // pred_check
        %p282 = pneg %p182
      $region34: #{mlp_forward.1} parent=11 // pred_check_branch
        %284 = sbr.rel (%p282) target = $region36
      $region35: #{mlp_forward.1} parent=11 // pred_region
        _
      $region36: #{mlp_forward.1} parent=11 // pred_fallthru
        _
      // Predicated region
      $region37: #{mlp_forward.1} parent=11 // pred_check
        %p285 = pneg %p203
      $region38: #{mlp_forward.1} parent=11 // pred_check_branch
        %287 = sbr.rel (%p285) target = $region40
      $region39: #{mlp_forward.1} parent=11 // pred_region
        _
      $region40: #{mlp_forward.1} parent=11 // pred_fallthru
        _
      // Predicated region
      $region41: #{mlp_forward.1} parent=11 // pred_check
        %p288 = pneg %p224
      $region42: #{mlp_forward.1} parent=11 // pred_check_branch
        %290 = sbr.rel (%p288) target = $region44
      $region43: #{mlp_forward.1} parent=11 // pred_region
        _
      $region44: #{mlp_forward.1} parent=11 // pred_fallthru
        _
    $region12: #{mlp_forward.1} parent=5 // pred_fallthru
      _
    %p291 = scmp.lt.s32.totalorder %s16, 2
    // Predicated region
    $region45: #{mlp_forward.1} parent=5 // pred_check
      %p292 = pneg %p291
    $region46: #{mlp_forward.1} parent=5 // pred_check_branch
      %294 = sbr.rel (%p292) target = $region48
    $region47: #{mlp_forward.1} parent=5 // pred_region
      // Predicated region
      $region49: #{mlp_forward.1} parent=47 // pred_check
        %p295 = pneg %p134
      $region50: #{mlp_forward.1} parent=47 // pred_check_branch
        %297 = sbr.rel (%p295) target = $region52
      $region51: #{mlp_forward.1} parent=47 // pred_region
        %s298 = smul.u32 2, %s24
        %p299 = scmp.lt.s32.totalorder %s23, 1
        %s300 = scalar_select %p299, %s23, 1
        %p301 = scmp.lt.s32.totalorder %s298, 1
        %s302 = scalar_select %p301, %s298, 1
        %s303 = smul.addr %s300, 6
        %s304 = sadd.s32 %s302, %s303
        %s305 = smul.addr %s304, 8
        %s306 = scalar_lea.vmem %s4, %s305
        %s307 = smul.u32 2, %s24
      $region52: #{mlp_forward.1} parent=47 // pred_fallthru
        _
    $region48: #{mlp_forward.1} parent=5 // pred_fallthru
      _
    %p308 = scmp.le.s32.totalorder 1, %s16
    %p309 = scmp.lt.s32.totalorder %s16, 3
    %p310 = pnand %p308, %p309
    %p311 = pneg %p310
    // Predicated region
    $region53: #{mlp_forward.1} parent=5 // pred_check
      _
    $region54: #{mlp_forward.1} parent=5 // pred_check_branch
      %313 = sbr.rel (%p310) target = $region56
    $region55: #{mlp_forward.1} parent=5 // pred_region
      %s314 = ssub.s32 %s16, 1
      %p315 = pneg %p49
      %p316 = pneg %p46
      %p317 = pneg %p70
      %p318 = pneg %p67
      %p319 = pneg %p91
      %p320 = pneg %p88
      %p321 = pneg %p112
      %p322 = pneg %p109
      %s323 = smul.u32 2, %s26
      %p324 = scmp.lt.s32.totalorder %s25, 1
      %s325 = scalar_select %p324, %s25, 1
      %p326 = scmp.lt.s32.totalorder %s323, 1
      %s327 = scalar_select %p326, %s323, 1
      %s328 = smul.addr %s325, 6
      %s329 = sadd.s32 %s327, %s328
      %s330 = smul.addr %s329, 8
      %s331 = scalar_lea.vmem %s4, %s330
      %p332 = pneg %p140
      %p333 = pneg %p137
      %p334 = pneg %p161
      %p335 = pneg %p158
      %p336 = pneg %p182
      %p337 = pneg %p179
      %p338 = pneg %p203
      %p339 = pneg %p200
      %p340 = pneg %p224
      %p341 = pneg %p221
      %p342 = pneg %p252
      %p343 = pneg %p249
      %s344 = smul.u32 2, %s26
      %p345 = scmp.lt.s32.totalorder %s25, 1
      %s346 = scalar_select %p345, %s25, 1
      %p347 = scmp.lt.s32.totalorder %s344, 1
      %s348 = scalar_select %p347, %s344, 1
      %s349 = smul.addr %s346, 6
      %s350 = sadd.s32 %s348, %s349
      %s351 = smul.addr %s350, 8
      %s352 = scalar_lea.vmem %s10, %s351
      %s353 = smul.u32 2, %s26
      %p354 = scmp.lt.s32.totalorder %s25, 1
      %s355 = scalar_select %p354, %s25, 1
      %p356 = scmp.lt.s32.totalorder %s353, 1
      %s357 = scalar_select %p356, %s353, 1
      %s358 = smul.addr %s355, 6
      %s359 = sadd.s32 %s357, %s358
      %s360 = smul.addr %s359, 8
      %s361 = scalar_lea.vmem %s4, %s360
      %s362 = smul.u32 2, %s26
      %s363 = smul.u32 2, %s26
      %p364 = scmp.lt.s32.totalorder %s25, 1
      %s365 = scalar_select %p364, %s25, 1
      %p366 = scmp.lt.s32.totalorder %s363, 1
      %s367 = scalar_select %p366, %s363, 1
      %s368 = smul.addr %s365, 6
      %s369 = sadd.s32 %s367, %s368
      %s370 = smul.addr %s369, 8
      %s371 = scalar_lea.vmem %s10, %s370
      %s372 = smul.u32 2, %s26
      %v373 = vld [vmem:[%s361] sm:$0xff]
      %v374 = vld [vmem:[%s361 + $0x8] sm:$0xff]
      %v375 = vld [vmem:[%s361 + $0x10] sm:$0xff]
      %v376 = vld [vmem:[%s361 + $0x18] sm:$0xff]
      %v377 = vld [vmem:[%s361 + $0x20] sm:$0xf]
      %v378 = vld [vmem:[%s361 + $0x28] sm:$0xf]
      %385 = vrot.lane.b32.xlu0 %v373, 32
      %v386 = vpop.permute.xlu0 %385
      %387 = vrot.lane.b32.xlu0 %v374, 32
      %v388 = vpop.permute.xlu0 %387
      %389 = vrot.lane.b32.xlu0 %v375, 32
      %v390 = vpop.permute.xlu0 %389
      %391 = vrot.lane.b32.xlu0 %v376, 32
      %v392 = vpop.permute.xlu0 %391
      %393 = vrot.lane.b32.xlu0 %v377, 32
      %v394 = vpop.permute.xlu0 %393
      %395 = vrot.lane.b32.xlu0 %v378, 32
      %v396 = vpop.permute.xlu0 %395
      %vm397 = vcmask 261120
      %v398 = vsel %vm397, %v386, %v388
      %v399 = vsel %vm397, %v390, %v392
      %v400 = vsel %vm397, %v394, %v396
      %vm410 = vcmask 1047808
      %411 = vst.msk [vmem:[#allocation2] sm:$0xff] %vm410, %v386
      %412 = vst [vmem:[#allocation2 + $0x8] sm:$0xff] %v398
      %413 = vst.msk [vmem:[#allocation2 + $0x10] sm:$0xff] %vm397, %v388
      %414 = vst.msk [vmem:[#allocation2 + $0x18] sm:$0xff] %vm410, %v390
      %415 = vst [vmem:[#allocation2 + $0x20] sm:$0xff] %v399
      %416 = vst.msk [vmem:[#allocation2 + $0x28] sm:$0xff] %vm397, %v392
      %vm417 = vcmask 1043712
      %418 = vst.msk [vmem:[#allocation2 + $0x30] sm:$0xf] %vm417, %v394
      %419 = vst [vmem:[#allocation2 + $0x38] sm:$0xf] %v400
      %vm420 = vcmask 257024
      %421 = vst.msk [vmem:[#allocation2 + $0x40] sm:$0xf] %vm420, %v396
      %p422 = scmp.eq.s32.totalorder %s26, 0
      // Predicated region
      $region57: #{mlp_forward.1} parent=55 // pred_check
        %p423 = pneg %p422
      $region58: #{mlp_forward.1} parent=55 // pred_check_branch
        %425 = sbr.rel (%p423) target = $region60
      $region59: #{mlp_forward.1} parent=55 // pred_region
        %426 = vst.msk [vmem:[#allocation2] sm:$0xff] %vm397, 0.0
        %427 = vst.msk [vmem:[#allocation2 + $0x18] sm:$0xff] %vm397, 0.0
        %428 = vst.msk [vmem:[#allocation2 + $0x30] sm:$0xf] %vm420, 0.0
        %vm429 = vcmask 523520
        %430 = vst.msk [vmem:[#allocation2 + $0x10] sm:$0xff] %vm429, 0.0
        %431 = vst.msk [vmem:[#allocation2 + $0x28] sm:$0xff] %vm429, 0.0
        %vm432 = vcmask 519424
        %433 = vst.msk [vmem:[#allocation2 + $0x40] sm:$0xf] %vm432, 0.0
      $region60: #{mlp_forward.1} parent=55 // pred_fallthru
        _
      %v434 = vld [vmem:[%s0] sm:$0x7]
      %v435 = vld [vmem:[%s1] sm:$0x7]
      %v436 = vld [vmem:[%s2] sm:$0xff]
      %v437 = vld [vmem:[%s2 + $0x8] sm:$0xff]
      %v438 = vld [vmem:[%s2 + $0x10] sm:$0xf]
      %v439 = vld [vmem:[#allocation2] sm:$0xff]
      %v440 = vld [vmem:[#allocation2 + $0x8] sm:$0xff]
      %v441 = vld [vmem:[#allocation2 + $0x10] sm:$0xff]
      %v442 = vld [vmem:[#allocation2 + $0x18] sm:$0xff]
      %v443 = vld [vmem:[#allocation2 + $0x20] sm:$0xff]
      %v444 = vld [vmem:[#allocation2 + $0x28] sm:$0xff]
      %v445 = vld [vmem:[#allocation2 + $0x30] sm:$0xf]
      %v446 = vld [vmem:[#allocation2 + $0x38] sm:$0xf]
      %v447 = vld [vmem:[#allocation2 + $0x40] sm:$0xf]
      %v449 = vlaneseq
      %v450 = vshrl.u32 %v449, 7
      %v451 = vsub.s32 0, %v450
      %v452 = vrot.slane %v434, %v451
      %v453 = vlaneseq
      %v454 = vshrl.u32 %v453, 7
      %v455 = vsub.s32 1, %v454
      %v456 = vrot.slane %v434, %v455
      %v457 = vlaneseq
      %v458 = vshrl.u32 %v457, 7
      %v459 = vsub.s32 2, %v458
      %v460 = vrot.slane %v434, %v459
      %461 = vrot.lane.b32.xlu0 %v452, 17
      %v462 = vpop.permute.xlu0 %461
      %463 = vrot.lane.b32.xlu0 %v456, 17
      %v464 = vpop.permute.xlu0 %463
      %465 = vrot.lane.b32.xlu0 %v460, 17
      %v466 = vpop.permute.xlu0 %465
      %vm467 = vcmask 138240
      %v468 = vsel %vm467, %v462, %v464
      %v469 = vsel %vm467, %v464, %v466
      %v473 = vmul.f32 %v439, %v462
      %v474 = vmul.f32 %v440, %v468
      %v475 = vmul.f32 %v441, %v469
      %v476 = vmul.f32 %v442, %v462
      %v477 = vmul.f32 %v443, %v468
      %v478 = vmul.f32 %v444, %v469
      %v479 = vmul.f32 %v445, %v462
      %v480 = vmul.f32 %v446, %v468
      %v481 = vmul.f32 %v447, %v469
      %v483 = vlaneseq
      %v484 = vshrl.u32 %v483, 7
      %v485 = vsub.s32 0, %v484
      %v486 = vrot.slane %v435, %v485
      %v487 = vlaneseq
      %v488 = vshrl.u32 %v487, 7
      %v489 = vsub.s32 1, %v488
      %v490 = vrot.slane %v435, %v489
      %v491 = vlaneseq
      %v492 = vshrl.u32 %v491, 7
      %v493 = vsub.s32 2, %v492
      %v494 = vrot.slane %v435, %v493
      %495 = vrot.lane.b32.xlu0 %v486, 15
      %v496 = vpop.permute.xlu0 %495
      %497 = vrot.lane.b32.xlu0 %v490, 15
      %v498 = vpop.permute.xlu0 %497
      %499 = vrot.lane.b32.xlu0 %v494, 15
      %v500 = vpop.permute.xlu0 %499
      %vm501 = vcmask 121856
      %v502 = vsel %vm501, %v496, %v498
      %v503 = vsel %vm501, %v498, %v500
      %v507 = vmul.f32 %v439, %v496
      %v508 = vmul.f32 %v440, %v502
      %v509 = vmul.f32 %v441, %v503
      %v510 = vmul.f32 %v442, %v496
      %v511 = vmul.f32 %v443, %v502
      %v512 = vmul.f32 %v444, %v503
      %v513 = vmul.f32 %v445, %v496
      %v514 = vmul.f32 %v446, %v502
      %v515 = vmul.f32 %v447, %v503
      %vm516 = vcmp.eq.s32.totalorder %v436, 0
      %vm517 = vcmp.eq.s32.totalorder %v437, 0
      %vm518 = vcmp.eq.s32.totalorder %v438, 0
      %vm519 = vcmp.eq.s32.totalorder %v436, 1
      %vm520 = vcmp.eq.s32.totalorder %v437, 1
      %vm521 = vcmp.eq.s32.totalorder %v438, 1
      %vm522 = vcmp.eq.s32.totalorder %v436, 2
      %vm523 = vcmp.eq.s32.totalorder %v437, 2
      %vm524 = vcmp.eq.s32.totalorder %v438, 2
      %vm525 = vcmp.eq.s32.totalorder %v436, 3
      %vm526 = vcmp.eq.s32.totalorder %v437, 3
      %vm527 = vcmp.eq.s32.totalorder %v438, 3
      %v528 = vsel %vm525, 1, 0
      %v529 = vsel %vm526, 1, 0
      %v530 = vsel %vm527, 1, 0
      %531 = vset.pattern.permute.xlu0 0
      %532 = vperm.xlu0 %531, %v528
      %v533 = vpop.permute.xlu0 %532
      %534 = vset.pattern.permute.xlu0 0
      %535 = vperm.xlu0 %534, %v529
      %v536 = vpop.permute.xlu0 %535
      %537 = vset.pattern.permute.xlu0 0
      %538 = vperm.xlu0 %537, %v530
      %v539 = vpop.permute.xlu0 %538
      %vm540 = vcmp.eq.s32.totalorder %v533, 1
      %vm541 = vcmp.eq.s32.totalorder %v536, 1
      %vm542 = vcmp.eq.s32.totalorder %v539, 1
      %552 = vrot.lane.b32.xlu0 %v439, 112
      %v553 = vpop.permute.xlu0 %552
      %554 = vrot.lane.b32.xlu0 %v440, 112
      %v555 = vpop.permute.xlu0 %554
      %556 = vrot.lane.b32.xlu0 %v441, 112
      %v557 = vpop.permute.xlu0 %556
      %558 = vrot.lane.b32.xlu0 %v442, 112
      %v559 = vpop.permute.xlu0 %558
      %560 = vrot.lane.b32.xlu0 %v443, 112
      %v561 = vpop.permute.xlu0 %560
      %562 = vrot.lane.b32.xlu0 %v444, 112
      %v563 = vpop.permute.xlu0 %562
      %564 = vrot.lane.b32.xlu0 %v445, 112
      %v565 = vpop.permute.xlu0 %564
      %566 = vrot.lane.b32.xlu0 %v446, 112
      %v567 = vpop.permute.xlu0 %566
      %568 = vrot.lane.b32.xlu0 %v447, 112
      %v569 = vpop.permute.xlu0 %568
      %vm570 = vcmask 916480
      %v571 = vsel %vm570, %v553, %v555
      %v572 = vsel %vm570, %v555, %v557
      %v573 = vsel %vm570, %v559, %v561
      %v574 = vsel %vm570, %v561, %v563
      %v575 = vsel %vm570, %v565, %v567
      %v576 = vsel %vm570, %v567, %v569
      %v586 = vsel %vm540, %v439, %v571
      %v587 = vsel %vm540, %v440, %v572
      %v588 = vsel %vm540, %v441, %v557
      %v589 = vsel %vm541, %v442, %v573
      %v590 = vsel %vm541, %v443, %v574
      %v591 = vsel %vm541, %v444, %v563
      %v592 = vsel %vm542, %v445, %v575
      %v593 = vsel %vm542, %v446, %v576
      %v594 = vsel %vm542, %v447, %v569
      %v595 = vsel %vm522, 1, 0
      %v596 = vsel %vm523, 1, 0
      %v597 = vsel %vm524, 1, 0
      %598 = vset.pattern.permute.xlu0 0
      %599 = vperm.xlu0 %598, %v595
      %v600 = vpop.permute.xlu0 %599
      %601 = vset.pattern.permute.xlu0 0
      %602 = vperm.xlu0 %601, %v596
      %v603 = vpop.permute.xlu0 %602
      %604 = vset.pattern.permute.xlu0 0
      %605 = vperm.xlu0 %604, %v597
      %v606 = vpop.permute.xlu0 %605
      %vm607 = vcmp.eq.s32.totalorder %v600, 1
      %vm608 = vcmp.eq.s32.totalorder %v603, 1
      %vm609 = vcmp.eq.s32.totalorder %v606, 1
      %619 = vrot.lane.b32.xlu0 %v586, 32
      %v620 = vpop.permute.xlu0 %619
      %621 = vrot.lane.b32.xlu0 %v587, 32
      %v622 = vpop.permute.xlu0 %621
      %623 = vrot.lane.b32.xlu0 %v588, 32
      %v624 = vpop.permute.xlu0 %623
      %625 = vrot.lane.b32.xlu0 %v589, 32
      %v626 = vpop.permute.xlu0 %625
      %627 = vrot.lane.b32.xlu0 %v590, 32
      %v628 = vpop.permute.xlu0 %627
      %629 = vrot.lane.b32.xlu0 %v591, 32
      %v630 = vpop.permute.xlu0 %629
      %631 = vrot.lane.b32.xlu0 %v592, 32
      %v632 = vpop.permute.xlu0 %631
      %633 = vrot.lane.b32.xlu0 %v593, 32
      %v634 = vpop.permute.xlu0 %633
      %635 = vrot.lane.b32.xlu0 %v594, 32
      %v636 = vpop.permute.xlu0 %635
      %v637 = vsel %vm397, %v620, %v622
      %v638 = vsel %vm397, %v622, %v624
      %v639 = vsel %vm397, %v626, %v628
      %v640 = vsel %vm397, %v628, %v630
      %v641 = vsel %vm397, %v632, %v634
      %v642 = vsel %vm397, %v634, %v636
      %v652 = vsel %vm607, %v439, %v620
      %v653 = vsel %vm607, %v440, %v637
      %v654 = vsel %vm607, %v441, %v638
      %v655 = vsel %vm608, %v442, %v626
      %v656 = vsel %vm608, %v443, %v639
      %v657 = vsel %vm608, %v444, %v640
      %v658 = vsel %vm609, %v445, %v632
      %v659 = vsel %vm609, %v446, %v641
      %v660 = vsel %vm609, %v447, %v642
      %v661 = vsel %vm519, 1, 0
      %v662 = vsel %vm520, 1, 0
      %v663 = vsel %vm521, 1, 0
      %664 = vset.pattern.permute.xlu0 0
      %665 = vperm.xlu0 %664, %v661
      %v666 = vpop.permute.xlu0 %665
      %667 = vset.pattern.permute.xlu0 0
      %668 = vperm.xlu0 %667, %v662
      %v669 = vpop.permute.xlu0 %668
      %670 = vset.pattern.permute.xlu0 0
      %671 = vperm.xlu0 %670, %v663
      %v672 = vpop.permute.xlu0 %671
      %vm673 = vcmp.eq.s32.totalorder %v666, 1
      %vm674 = vcmp.eq.s32.totalorder %v669, 1
      %vm675 = vcmp.eq.s32.totalorder %v672, 1
      %685 = vrot.lane.b32.xlu0 %v652, 111
      %v686 = vpop.permute.xlu0 %685
      %687 = vrot.lane.b32.xlu0 %v653, 111
      %v688 = vpop.permute.xlu0 %687
      %689 = vrot.lane.b32.xlu0 %v654, 111
      %v690 = vpop.permute.xlu0 %689
      %691 = vrot.lane.b32.xlu0 %v655, 111
      %v692 = vpop.permute.xlu0 %691
      %693 = vrot.lane.b32.xlu0 %v656, 111
      %v694 = vpop.permute.xlu0 %693
      %695 = vrot.lane.b32.xlu0 %v657, 111
      %v696 = vpop.permute.xlu0 %695
      %697 = vrot.lane.b32.xlu0 %v658, 111
      %v698 = vpop.permute.xlu0 %697
      %699 = vrot.lane.b32.xlu0 %v659, 111
      %v700 = vpop.permute.xlu0 %699
      %701 = vrot.lane.b32.xlu0 %v660, 111
      %v702 = vpop.permute.xlu0 %701
      %vm703 = vcmask 908288
      %v704 = vsel %vm703, %v686, %v688
      %v705 = vsel %vm703, %v688, %v690
      %v706 = vsel %vm703, %v692, %v694
      %v707 = vsel %vm703, %v694, %v696
      %v708 = vsel %vm703, %v698, %v700
      %v709 = vsel %vm703, %v700, %v702
      %v719 = vsel %vm673, %v507, %v704
      %v720 = vsel %vm673, %v508, %v705
      %v721 = vsel %vm673, %v509, %v690
      %v722 = vsel %vm674, %v510, %v706
      %v723 = vsel %vm674, %v511, %v707
      %v724 = vsel %vm674, %v512, %v696
      %v725 = vsel %vm675, %v513, %v708
      %v726 = vsel %vm675, %v514, %v709
      %v727 = vsel %vm675, %v515, %v702
      %v728 = vsel %vm516, 1, 0
      %v729 = vsel %vm517, 1, 0
      %v730 = vsel %vm518, 1, 0
      %731 = vset.pattern.permute.xlu0 0
      %732 = vperm.xlu0 %731, %v728
      %v733 = vpop.permute.xlu0 %732
      %734 = vset.pattern.permute.xlu0 0
      %735 = vperm.xlu0 %734, %v729
      %v736 = vpop.permute.xlu0 %735
      %737 = vset.pattern.permute.xlu0 0
      %738 = vperm.xlu0 %737, %v730
      %v739 = vpop.permute.xlu0 %738
      %vm740 = vcmp.eq.s32.totalorder %v733, 1
      %vm741 = vcmp.eq.s32.totalorder %v736, 1
      %vm742 = vcmp.eq.s32.totalorder %v739, 1
      %752 = vrot.lane.b32.xlu0 %v719, 2
      %v753 = vpop.permute.xlu0 %752
      %754 = vrot.lane.b32.xlu0 %v720, 2
      %v755 = vpop.permute.xlu0 %754
      %756 = vrot.lane.b32.xlu0 %v721, 2
      %v757 = vpop.permute.xlu0 %756
      %758 = vrot.lane.b32.xlu0 %v722, 2
      %v759 = vpop.permute.xlu0 %758
      %760 = vrot.lane.b32.xlu0 %v723, 2
      %v761 = vpop.permute.xlu0 %760
      %762 = vrot.lane.b32.xlu0 %v724, 2
      %v763 = vpop.permute.xlu0 %762
      %764 = vrot.lane.b32.xlu0 %v725, 2
      %v765 = vpop.permute.xlu0 %764
      %766 = vrot.lane.b32.xlu0 %v726, 2
      %v767 = vpop.permute.xlu0 %766
      %768 = vrot.lane.b32.xlu0 %v727, 2
      %v769 = vpop.permute.xlu0 %768
      %vm770 = vcmask 15360
      %v771 = vsel %vm770, %v753, %v755
      %v772 = vsel %vm770, %v755, %v757
      %v773 = vsel %vm770, %v759, %v761
      %v774 = vsel %vm770, %v761, %v763
      %v775 = vsel %vm770, %v765, %v767
      %v776 = vsel %vm770, %v767, %v769
      %v786 = vsel %vm740, %v473, %v753
      %v787 = vsel %vm740, %v474, %v771
      %v788 = vsel %vm740, %v475, %v772
      %v789 = vsel %vm741, %v476, %v759
      %v790 = vsel %vm741, %v477, %v773
      %v791 = vsel %vm741, %v478, %v774
      %v792 = vsel %vm742, %v479, %v765
      %v793 = vsel %vm742, %v480, %v775
      %v794 = vsel %vm742, %v481, %v776
      %v795 = vld [vmem:[%s6] sm:$0xff]
      %v796 = vld [vmem:[%s6 + $0x8] sm:$0xff]
      %v797 = vld [vmem:[%s6 + $0x10] sm:$0xff]
      %v798 = vld [vmem:[%s6 + $0x18] sm:$0xff]
      %v799 = vld [vmem:[%s6 + $0x20] sm:$0xff]
      %v800 = vld [vmem:[%s7] sm:$0xff]
      %v801 = vld [vmem:[%s7 + $0x8] sm:$0xff]
      %v802 = vld [vmem:[%s7 + $0x10] sm:$0xff]
      %v803 = vld [vmem:[%s7 + $0x18] sm:$0xff]
      %v804 = vld [vmem:[%s7 + $0x20] sm:$0xff]
      %806 = vset.pattern.permute.xlu0 0
      %807 = vperm.xlu0 %806, %v800
      %v808 = vpop.permute.xlu0 %807
      %811 = vset.pattern.permute.xlu0 0
      %812 = vperm.xlu0 %811, %v801
      %v813 = vpop.permute.xlu0 %812
      %816 = vset.pattern.permute.xlu0 0
      %817 = vperm.xlu0 %816, %v802
      %v818 = vpop.permute.xlu0 %817
      %821 = vset.pattern.permute.xlu0 0
      %822 = vperm.xlu0 %821, %v803
      %v823 = vpop.permute.xlu0 %822
      %826 = vset.pattern.permute.xlu0 0
      %827 = vperm.xlu0 %826, %v804
      %v828 = vpop.permute.xlu0 %827
      %839 = vrot.lane.b32.xlu0 %v786, 111
      %v840 = vpop.permute.xlu0 %839
      %841 = vrot.lane.b32.xlu0 %v787, 111
      %v842 = vpop.permute.xlu0 %841
      %843 = vrot.lane.b32.xlu0 %v788, 111
      %v844 = vpop.permute.xlu0 %843
      %845 = vrot.lane.b32.xlu0 %v789, 111
      %v846 = vpop.permute.xlu0 %845
      %847 = vrot.lane.b32.xlu0 %v790, 111
      %v848 = vpop.permute.xlu0 %847
      %849 = vrot.lane.b32.xlu0 %v791, 111
      %v850 = vpop.permute.xlu0 %849
      %851 = vrot.lane.b32.xlu0 %v792, 111
      %v852 = vpop.permute.xlu0 %851
      %853 = vrot.lane.b32.xlu0 %v793, 111
      %v854 = vpop.permute.xlu0 %853
      %855 = vrot.lane.b32.xlu0 %v794, 111
      %v856 = vpop.permute.xlu0 %855
      %v857 = vsel %vm703, %v840, %v842
      %v858 = vsel %vm703, %v842, %v844
      %v859 = vsel %vm703, %v846, %v848
      %v860 = vsel %vm703, %v848, %v850
      %v861 = vsel %vm703, %v852, %v854
      %v862 = vsel %vm703, %v854, %v856
      %vm869 = vcmask 162816
      %v871 = vsel %vm869, %v795, 0
      %v874 = vsel %vm869, %v796, 0
      %v877 = vsel %vm869, %v797, 0
      %v880 = vsel %vm869, %v798, 0
      %v883 = vsel %vm869, %v799, 0
      %vm885 = vcmask 1043456
      %v886 = vsel %vm885, %v861, 0
      %v888 = vsel %vm885, %v862, 0
      %v890 = vsel %vm885, %v856, 0
      %892 = vmatprep.subr.mxu0 0.0
      %893 = vmatpush1.msra.mxu0 0.0
      %894 = vmatprep.subr.mxu0 0.0
      %895 = vmatpush1.msra.mxu0 0.0
      %896 = vmatprep.subr.mxu0 0.0
      %897 = vmatpush1.msra.mxu0 0.0
      %898 = vmatprep.subr.mxu0 0.0
      %899 = vmatpush1.msra.mxu0 0.0
      %900 = vmatprep.subr.mxu0 0.0
      %901 = vmatpush1.msra.mxu0 0.0
      %902 = vmatprep.subr.mxu0 0.0
      %903 = vmatpush1.msra.mxu0 0.0
      %904 = vmatprep.subr.mxu0 0.0
      %905 = vmatpush1.msra.mxu0 0.0
      %906 = vmatprep.subr.mxu0 0.0
      %907 = vmatpush1.msra.mxu0 0.0
      %908 = vmatprep.subr.mxu0 0.0
      %909 = vmatpush1.msra.mxu0 0.0
      %910 = vmatprep.subr.mxu0 0.0
      %911 = vmatpush1.msra.mxu0 0.0
      %912 = vmatprep.subr.mxu0 0.0
      %913 = vmatpush1.msra.mxu0 0.0
      %914 = vmatprep.subr.mxu0 0.0
      %915 = vmatpush1.msra.mxu0 0.0
      %916 = vmatprep.subr.mxu0 0.0
      %917 = vmatpush1.msra.mxu0 0.0
      %918 = vmatprep.subr.mxu0 %v888
      %919 = vmatpush1.msra.mxu0 %v886
      %920 = vmatprep.subr.mxu0 %v860
      %921 = vmatpush1.msra.mxu0 %v859
      %922 = vmatprep.subr.mxu0 %v858
      %923 = vmatpush1.msra.mxu0 %v857
      %924 = vmatprep.subr.mxu0 0.0
      %925 = vmatpush2.msra.mxu0 0.0
      %926 = vmatprep.subr.mxu0 0.0
      %927 = vmatpush2.msra.mxu0 0.0
      %928 = vmatprep.subr.mxu0 0.0
      %929 = vmatpush2.msra.mxu0 0.0
      %930 = vmatprep.subr.mxu0 0.0
      %931 = vmatpush2.msra.mxu0 0.0
      %932 = vmatprep.subr.mxu0 0.0
      %933 = vmatpush2.msra.mxu0 0.0
      %934 = vmatprep.subr.mxu0 0.0
      %935 = vmatpush2.msra.mxu0 0.0
      %936 = vmatprep.subr.mxu0 0.0
      %937 = vmatpush2.msra.mxu0 0.0
      %938 = vmatprep.subr.mxu0 0.0
      %939 = vmatpush2.msra.mxu0 0.0
      %940 = vmatprep.subr.mxu0 0.0
      %941 = vmatpush2.msra.mxu0 0.0
      %942 = vmatprep.subr.mxu0 0.0
      %943 = vmatpush2.msra.mxu0 0.0
      %944 = vmatprep.subr.mxu0 0.0
      %945 = vmatpush2.msra.mxu0 0.0
      %946 = vmatprep.subr.mxu0 0.0
      %947 = vmatpush2.msra.mxu0 0.0
      %948 = vmatprep.subr.mxu0 0.0
      %949 = vmatpush2.msra.mxu0 0.0
      %950 = vmatprep.subr.mxu0 0.0
      %951 = vmatpush2.msra.mxu0 0.0
      %952 = vmatprep.subr.mxu0 0.0
      %953 = vmatpush2.msra.mxu0 0.0
      %954 = vmatprep.subr.mxu0 0.0
      %955 = vmatpush2.msra.mxu0 0.0
      %956 = vmatprep.mubr.f32.mxu0 0.0
      %957 = vmatmul.mubr.f32.gmra.mxu0 %v871
      %v958 = vpop.f32.mrf.mxu0
      %v959 = vadd.f32 %v808, %v958
      %v960 = vpop.f32.mrf.mxu0
      %v961 = vadd.f32 %v808, %v960
      %962 = vmatprep.mubr.f32.mxu0 0.0
      %963 = vmatmul.mubr.f32.gmra.mxu0 %v874
      %v964 = vpop.f32.mrf.mxu0
      %v965 = vadd.f32 %v813, %v964
      %v966 = vpop.f32.mrf.mxu0
      %v967 = vadd.f32 %v813, %v966
      %968 = vmatprep.mubr.f32.mxu0 0.0
      %969 = vmatmul.mubr.f32.gmra.mxu0 %v877
      %v970 = vpop.f32.mrf.mxu0
      %v971 = vadd.f32 %v818, %v970
      %v972 = vpop.f32.mrf.mxu0
      %v973 = vadd.f32 %v818, %v972
      %974 = vmatprep.mubr.f32.mxu0 0.0
      %975 = vmatmul.mubr.f32.gmra.mxu0 %v880
      %v976 = vpop.f32.mrf.mxu0
      %v977 = vadd.f32 %v823, %v976
      %v978 = vpop.f32.mrf.mxu0
      %v979 = vadd.f32 %v823, %v978
      %980 = vmatprep.mubr.f32.mxu0 0.0
      %981 = vmatmul.mubr.f32.gmra.mxu0 %v883
      %v982 = vpop.f32.mrf.mxu0
      %v983 = vadd.f32 %v828, %v982
      %v984 = vpop.f32.mrf.mxu0
      %v985 = vadd.f32 %v828, %v984
      %986 = vdwg.mxu0
      %987 = vmatprep.subr.mxu0 0.0
      %988 = vmatpush1.msra.mxu0 0.0
      %989 = vmatprep.subr.mxu0 0.0
      %990 = vmatpush1.msra.mxu0 0.0
      %991 = vmatprep.subr.mxu0 0.0
      %992 = vmatpush1.msra.mxu0 0.0
      %993 = vmatprep.subr.mxu0 0.0
      %994 = vmatpush1.msra.mxu0 0.0
      %995 = vmatprep.subr.mxu0 0.0
      %996 = vmatpush1.msra.mxu0 0.0
      %997 = vmatprep.subr.mxu0 0.0
      %998 = vmatpush1.msra.mxu0 0.0
      %999 = vmatprep.subr.mxu0 0.0
      %1000 = vmatpush1.msra.mxu0 0.0
      %1001 = vmatprep.subr.mxu0 0.0
      %1002 = vmatpush1.msra.mxu0 0.0
      %1003 = vmatprep.subr.mxu0 0.0
      %1004 = vmatpush1.msra.mxu0 0.0
      %1005 = vmatprep.subr.mxu0 0.0
      %1006 = vmatpush1.msra.mxu0 0.0
      %1007 = vmatprep.subr.mxu0 0.0
      %1008 = vmatpush1.msra.mxu0 0.0
      %1009 = vmatprep.subr.mxu0 0.0
      %1010 = vmatpush1.msra.mxu0 0.0
      %1011 = vmatprep.subr.mxu0 0.0
      %1012 = vmatpush1.msra.mxu0 0.0
      %1013 = vmatprep.subr.mxu0 0.0
      %1014 = vmatpush1.msra.mxu0 %v890
      %1015 = vmatprep.subr.mxu0 0.0
      %1016 = vmatpush1.msra.mxu0 %v850
      %1017 = vmatprep.subr.mxu0 0.0
      %1018 = vmatpush1.msra.mxu0 %v844
      %1019 = vmatprep.subr.mxu0 0.0
      %1020 = vmatpush2.msra.mxu0 0.0
      %1021 = vmatprep.subr.mxu0 0.0
      %1022 = vmatpush2.msra.mxu0 0.0
      %1023 = vmatprep.subr.mxu0 0.0
      %1024 = vmatpush2.msra.mxu0 0.0
      %1025 = vmatprep.subr.mxu0 0.0
      %1026 = vmatpush2.msra.mxu0 0.0
      %1027 = vmatprep.subr.mxu0 0.0
      %1028 = vmatpush2.msra.mxu0 0.0
      %1029 = vmatprep.subr.mxu0 0.0
      %1030 = vmatpush2.msra.mxu0 0.0
      %1031 = vmatprep.subr.mxu0 0.0
      %1032 = vmatpush2.msra.mxu0 0.0
      %1033 = vmatprep.subr.mxu0 0.0
      %1034 = vmatpush2.msra.mxu0 0.0
      %1035 = vmatprep.subr.mxu0 0.0
      %1036 = vmatpush2.msra.mxu0 0.0
      %1037 = vmatprep.subr.mxu0 0.0
      %1038 = vmatpush2.msra.mxu0 0.0
      %1039 = vmatprep.subr.mxu0 0.0
      %1040 = vmatpush2.msra.mxu0 0.0
      %1041 = vmatprep.subr.mxu0 0.0
      %1042 = vmatpush2.msra.mxu0 0.0
      %1043 = vmatprep.subr.mxu0 0.0
      %1044 = vmatpush2.msra.mxu0 0.0
      %1045 = vmatprep.subr.mxu0 0.0
      %1046 = vmatpush2.msra.mxu0 0.0
      %1047 = vmatprep.subr.mxu0 0.0
      %1048 = vmatpush2.msra.mxu0 0.0
      %1049 = vmatprep.subr.mxu0 0.0
      %1050 = vmatpush2.msra.mxu0 0.0
      %1051 = vmatprep.mubr.f32.mxu0 0.0
      %1052 = vmatmul.mubr.f32.gmra.mxu0 %v871
      %v1053 = vpop.f32.mrf.mxu0
      %v1054 = vadd.f32 %v808, %v1053
      %v1055 = vpop.f32.mrf.mxu0
      %1056 = vmatprep.mubr.f32.mxu0 0.0
      %1057 = vmatmul.mubr.f32.gmra.mxu0 %v874
      %v1058 = vpop.f32.mrf.mxu0
      %v1059 = vadd.f32 %v813, %v1058
      %v1060 = vpop.f32.mrf.mxu0
      %1061 = vmatprep.mubr.f32.mxu0 0.0
      %1062 = vmatmul.mubr.f32.gmra.mxu0 %v877
      %v1063 = vpop.f32.mrf.mxu0
      %v1064 = vadd.f32 %v818, %v1063
      %v1065 = vpop.f32.mrf.mxu0
      %1066 = vmatprep.mubr.f32.mxu0 0.0
      %1067 = vmatmul.mubr.f32.gmra.mxu0 %v880
      %v1068 = vpop.f32.mrf.mxu0
      %v1069 = vadd.f32 %v823, %v1068
      %v1070 = vpop.f32.mrf.mxu0
      %1071 = vmatprep.mubr.f32.mxu0 0.0
      %1072 = vmatmul.mubr.f32.gmra.mxu0 %v883
      %v1073 = vpop.f32.mrf.mxu0
      %v1074 = vadd.f32 %v828, %v1073
      %v1075 = vpop.f32.mrf.mxu0
      %1076 = vdwg.mxu0
      %v1077 = vmul.f32 %v959, 0.5
      %v1078 = vmul.f32 %v961, 0.5
      %v1079 = vmul.f32 %v1054, 0.5
      %v1080 = vmul.f32 %v965, 0.5
      %v1081 = vmul.f32 %v967, 0.5
      %v1082 = vmul.f32 %v1059, 0.5
      %v1083 = vmul.f32 %v971, 0.5
      %v1084 = vmul.f32 %v973, 0.5
      %v1085 = vmul.f32 %v1064, 0.5
      %v1086 = vmul.f32 %v977, 0.5
      %v1087 = vmul.f32 %v979, 0.5
      %v1088 = vmul.f32 %v1069, 0.5
      %v1089 = vmul.f32 %v983, 0.5
      %v1090 = vmul.f32 %v985, 0.5
      %v1091 = vmul.f32 %v1074, 0.5
      %v1092 = vmul.f32 %v959, 0.70710677
      %v1093 = vmul.f32 %v961, 0.70710677
      %v1094 = vmul.f32 %v1054, 0.70710677
      %v1095 = vmul.f32 %v965, 0.70710677
      %v1096 = vmul.f32 %v967, 0.70710677
      %v1097 = vmul.f32 %v1059, 0.70710677
      %v1098 = vmul.f32 %v971, 0.70710677
      %v1099 = vmul.f32 %v973, 0.70710677
      %v1100 = vmul.f32 %v1064, 0.70710677
      %v1101 = vmul.f32 %v977, 0.70710677
      %v1102 = vmul.f32 %v979, 0.70710677
      %v1103 = vmul.f32 %v1069, 0.70710677
      %v1104 = vmul.f32 %v983, 0.70710677
      %v1105 = vmul.f32 %v985, 0.70710677
      %v1106 = vmul.f32 %v1074, 0.70710677
      %v1107 = verf.f32.pop %v1092
      %v1108 = verf.f32.pop %v1093
      %v1109 = verf.f32.pop %v1094
      %v1110 = verf.f32.pop %v1095
      %v1111 = verf.f32.pop %v1096
      %v1112 = verf.f32.pop %v1097
      %v1113 = verf.f32.pop %v1098
      %v1114 = verf.f32.pop %v1099
      %v1115 = verf.f32.pop %v1100
      %v1116 = verf.f32.pop %v1101
      %v1117 = verf.f32.pop %v1102
      %v1118 = verf.f32.pop %v1103
      %v1119 = verf.f32.pop %v1104
      %v1120 = verf.f32.pop %v1105
      %v1121 = verf.f32.pop %v1106
      %v1122 = vadd.f32 %v1107, 1.0
      %v1123 = vadd.f32 %v1108, 1.0
      %v1124 = vadd.f32 %v1109, 1.0
      %v1125 = vadd.f32 %v1110, 1.0
      %v1126 = vadd.f32 %v1111, 1.0
      %v1127 = vadd.f32 %v1112, 1.0
      %v1128 = vadd.f32 %v1113, 1.0
      %v1129 = vadd.f32 %v1114, 1.0
      %v1130 = vadd.f32 %v1115, 1.0
      %v1131 = vadd.f32 %v1116, 1.0
      %v1132 = vadd.f32 %v1117, 1.0
      %v1133 = vadd.f32 %v1118, 1.0
      %v1134 = vadd.f32 %v1119, 1.0
      %v1135 = vadd.f32 %v1120, 1.0
      %v1136 = vadd.f32 %v1121, 1.0
      %v1137 = vmul.f32 %v1077, %v1122
      %v1138 = vmul.f32 %v1078, %v1123
      %v1139 = vmul.f32 %v1079, %v1124
      %v1140 = vmul.f32 %v1080, %v1125
      %v1141 = vmul.f32 %v1081, %v1126
      %v1142 = vmul.f32 %v1082, %v1127
      %v1143 = vmul.f32 %v1083, %v1128
      %v1144 = vmul.f32 %v1084, %v1129
      %v1145 = vmul.f32 %v1085, %v1130
      %v1146 = vmul.f32 %v1086, %v1131
      %v1147 = vmul.f32 %v1087, %v1132
      %v1148 = vmul.f32 %v1088, %v1133
      %v1149 = vmul.f32 %v1089, %v1134
      %v1150 = vmul.f32 %v1090, %v1135
      %v1151 = vmul.f32 %v1091, %v1136
      %1152 = vst [vmem:[#allocation3] sm:$0xff] %v1137
      %1153 = vst [vmem:[#allocation3 + $0x8] sm:$0xff] %v1138
      %1154 = vst.msk [vmem:[#allocation3 + $0x10] sm:$0xff] %vm397, %v1139
      %1155 = vst [vmem:[#allocation3 + $0x18] sm:$0xff] %v1140
      %1156 = vst [vmem:[#allocation3 + $0x20] sm:$0xff] %v1141
      %1157 = vst.msk [vmem:[#allocation3 + $0x28] sm:$0xff] %vm397, %v1142
      %1158 = vst [vmem:[#allocation3 + $0x30] sm:$0xff] %v1143
      %1159 = vst [vmem:[#allocation3 + $0x38] sm:$0xff] %v1144
      %1160 = vst.msk [vmem:[#allocation3 + $0x40] sm:$0xff] %vm397, %v1145
      %1161 = vst [vmem:[#allocation3 + $0x48] sm:$0xff] %v1146
      %1162 = vst [vmem:[#allocation3 + $0x50] sm:$0xff] %v1147
      %1163 = vst.msk [vmem:[#allocation3 + $0x58] sm:$0xff] %vm397, %v1148
      %1164 = vst [vmem:[#allocation3 + $0x60] sm:$0xff] %v1149
      %1165 = vst [vmem:[#allocation3 + $0x68] sm:$0xff] %v1150
      %1166 = vst.msk [vmem:[#allocation3 + $0x70] sm:$0xff] %vm397, %v1151
      // Predicated region
      $region61: #{mlp_forward.1} parent=55 // pred_check
        %p1167 = pneg %p422
      $region62: #{mlp_forward.1} parent=55 // pred_check_branch
        %1169 = sbr.rel (%p1167) target = $region64
      $region63: #{mlp_forward.1} parent=55 // pred_region
        %vm1170 = vcmask 130048
        %1171 = vst.msk [vmem:[#allocation3] sm:$0xff] %vm1170, 0.0
        %1172 = vst.msk [vmem:[#allocation3 + $0x18] sm:$0xff] %vm1170, 0.0
        %1173 = vst.msk [vmem:[#allocation3 + $0x30] sm:$0xff] %vm1170, 0.0
        %1174 = vst.msk [vmem:[#allocation3 + $0x48] sm:$0xff] %vm1170, 0.0
        %1175 = vst.msk [vmem:[#allocation3 + $0x60] sm:$0xff] %vm1170, 0.0
        %vm1176 = vcmask 261248
        %1177 = vst.msk [vmem:[#allocation3 + $0x10] sm:$0xff] %vm1176, 0.0
        %1178 = vst.msk [vmem:[#allocation3 + $0x28] sm:$0xff] %vm1176, 0.0
        %1179 = vst.msk [vmem:[#allocation3 + $0x40] sm:$0xff] %vm1176, 0.0
        %1180 = vst.msk [vmem:[#allocation3 + $0x58] sm:$0xff] %vm1176, 0.0
        %1181 = vst.msk [vmem:[#allocation3 + $0x70] sm:$0xff] %vm1176, 0.0
      $region64: #{mlp_forward.1} parent=55 // pred_fallthru
        _
      %v1182 = vld [vmem:[#allocation3] sm:$0xff]
      %v1183 = vld [vmem:[#allocation3 + $0x8] sm:$0xff]
      %v1184 = vld [vmem:[#allocation3 + $0x10] sm:$0xff]
      %v1186 = vmul.f32 %v1182, %v462
      %v1187 = vmul.f32 %v1183, %v468
      %v1188 = vmul.f32 %v1184, %v464
      %v1189 = vld [vmem:[#allocation3 + $0x18] sm:$0xff]
      %v1190 = vld [vmem:[#allocation3 + $0x20] sm:$0xff]
      %v1191 = vld [vmem:[#allocation3 + $0x28] sm:$0xff]
      %v1193 = vmul.f32 %v1189, %v496
      %v1194 = vmul.f32 %v1190, %v502
      %v1195 = vmul.f32 %v1191, %v498
      %v1196 = vld [vmem:[#allocation3 + $0x30] sm:$0xff]
      %v1197 = vld [vmem:[#allocation3 + $0x38] sm:$0xff]
      %v1198 = vld [vmem:[#allocation3 + $0x40] sm:$0xff]
      %v1199 = vld [vmem:[#allocation3 + $0x48] sm:$0xff]
      %v1200 = vld [vmem:[#allocation3 + $0x50] sm:$0xff]
      %v1201 = vld [vmem:[#allocation3 + $0x60] sm:$0xff]
      %v1202 = vld [vmem:[#allocation3 + $0x68] sm:$0xff]
      %v1203 = vld [vmem:[#allocation3 + $0x70] sm:$0xff]
      %1207 = vrot.lane.b32.xlu0 %v1193, 2
      %v1208 = vpop.permute.xlu0 %1207
      %1209 = vrot.lane.b32.xlu0 %v1194, 2
      %v1210 = vpop.permute.xlu0 %1209
      %1211 = vrot.lane.b32.xlu0 %v1195, 2
      %v1212 = vpop.permute.xlu0 %1211
      %v1213 = vsel %vm770, %v1208, %v1210
      %v1214 = vsel %vm770, %v1210, %v1212
      %1218 = vrot.lane.b32.xlu0 %v1196, 113
      %v1219 = vpop.permute.xlu0 %1218
      %1220 = vrot.lane.b32.xlu0 %v1197, 113
      %v1221 = vpop.permute.xlu0 %1220
      %1222 = vrot.lane.b32.xlu0 %v1198, 113
      %v1223 = vpop.permute.xlu0 %1222
      %vm1224 = vcmask 924672
      %v1225 = vsel %vm1224, %v1219, %v1221
      %v1226 = vsel %vm1224, %v1221, %v1223
      %1229 = vrot.lane.b32.xlu0 %v1199, 17
      %v1230 = vpop.permute.xlu0 %1229
      %1231 = vrot.lane.b32.xlu0 %v1200, 17
      %v1232 = vpop.permute.xlu0 %1231
      %v1233 = vsel %vm467, %v1230, %v1232
      %1237 = vrot.lane.b32.xlu0 %v1201, 1
      %v1238 = vpop.permute.xlu0 %1237
      %1239 = vrot.lane.b32.xlu0 %v1202, 1
      %v1240 = vpop.permute.xlu0 %1239
      %1241 = vrot.lane.b32.xlu0 %v1203, 1
      %v1242 = vpop.permute.xlu0 %1241
      %vm1243 = vcmask 7168
      %v1244 = vsel %vm1243, %v1238, %v1240
      %v1245 = vsel %vm1243, %v1240, %v1242
      %v1246 = vld [vmem:[%s8] sm:$0xff]
      %v1247 = vld [vmem:[%s8 + $0x8] sm:$0xff]
      %v1248 = vld [vmem:[%s8 + $0x10] sm:$0xf]
      %v1249 = vld [vmem:[%s9] sm:$0xff]
      %v1250 = vld [vmem:[%s9 + $0x8] sm:$0xff]
      %v1251 = vld [vmem:[%s9 + $0x10] sm:$0xf]
      %1253 = vset.pattern.permute.xlu0 0
      %1254 = vperm.xlu0 %1253, %v1249
      %v1255 = vpop.permute.xlu0 %1254
      %1258 = vset.pattern.permute.xlu0 0
      %1259 = vperm.xlu0 %1258, %v1250
      %v1260 = vpop.permute.xlu0 %1259
      %1263 = vset.pattern.permute.xlu0 0
      %1264 = vperm.xlu0 %1263, %v1251
      %v1265 = vpop.permute.xlu0 %1264
      %1270 = vrot.lane.b32.xlu0 %v1186, 111
      %v1271 = vpop.permute.xlu0 %1270
      %1272 = vrot.lane.b32.xlu0 %v1187, 111
      %v1273 = vpop.permute.xlu0 %1272
      %1274 = vrot.lane.b32.xlu0 %v1188, 111
      %v1275 = vpop.permute.xlu0 %1274
      %1276 = vrot.lane.b32.xlu0 %v1208, 111
      %v1277 = vpop.permute.xlu0 %1276
      %1278 = vrot.lane.b32.xlu0 %v1213, 111
      %v1279 = vpop.permute.xlu0 %1278
      %1280 = vrot.lane.b32.xlu0 %v1214, 111
      %v1281 = vpop.permute.xlu0 %1280
      %1282 = vrot.lane.b32.xlu0 %v1225, 111
      %v1283 = vpop.permute.xlu0 %1282
      %1284 = vrot.lane.b32.xlu0 %v1226, 111
      %v1285 = vpop.permute.xlu0 %1284
      %1286 = vrot.lane.b32.xlu0 %v1223, 111
      %v1287 = vpop.permute.xlu0 %1286
      %1288 = vrot.lane.b32.xlu0 %v1230, 111
      %v1289 = vpop.permute.xlu0 %1288
      %1290 = vrot.lane.b32.xlu0 %v1233, 111
      %v1291 = vpop.permute.xlu0 %1290
      %1292 = vrot.lane.b32.xlu0 %v1232, 111
      %v1293 = vpop.permute.xlu0 %1292
      %1294 = vrot.lane.b32.xlu0 %v1238, 111
      %v1295 = vpop.permute.xlu0 %1294
      %1296 = vrot.lane.b32.xlu0 %v1244, 111
      %v1297 = vpop.permute.xlu0 %1296
      %1298 = vrot.lane.b32.xlu0 %v1245, 111
      %v1299 = vpop.permute.xlu0 %1298
      %v1300 = vsel %vm703, %v1271, %v1273
      %v1301 = vsel %vm703, %v1273, %v1275
      %v1302 = vsel %vm703, %v1277, %v1279
      %v1303 = vsel %vm703, %v1279, %v1281
      %v1304 = vsel %vm703, %v1283, %v1285
      %v1305 = vsel %vm703, %v1285, %v1287
      %v1306 = vsel %vm703, %v1289, %v1291
      %v1307 = vsel %vm703, %v1291, %v1293
      %v1308 = vsel %vm703, %v1295, %v1297
      %v1309 = vsel %vm703, %v1297, %v1299
      %vm1320 = vcmask 326656
      %v1322 = vsel %vm1320, %v1246, 0
      %v1325 = vsel %vm1320, %v1247, 0
      %v1328 = vsel %vm1320, %v1248, 0
      %1330 = vmatprep.subr.mxu0 0.0
      %1331 = vmatpush1.msra.mxu0 0.0
      %1332 = vmatprep.subr.mxu0 0.0
      %1333 = vmatpush1.msra.mxu0 0.0
      %1334 = vmatprep.subr.mxu0 0.0
      %1335 = vmatpush1.msra.mxu0 0.0
      %1336 = vmatprep.subr.mxu0 0.0
      %1337 = vmatpush1.msra.mxu0 0.0
      %1338 = vmatprep.subr.mxu0 0.0
      %1339 = vmatpush1.msra.mxu0 0.0
      %1340 = vmatprep.subr.mxu0 0.0
      %1341 = vmatpush1.msra.mxu0 0.0
      %1342 = vmatprep.subr.mxu0 0.0
      %1343 = vmatpush1.msra.mxu0 0.0
      %1344 = vmatprep.subr.mxu0 0.0
      %1345 = vmatpush1.msra.mxu0 0.0
      %1346 = vmatprep.subr.mxu0 0.0
      %1347 = vmatpush1.msra.mxu0 0.0
      %1348 = vmatprep.subr.mxu0 0.0
      %1349 = vmatpush1.msra.mxu0 0.0
      %1350 = vmatprep.subr.mxu0 0.0
      %1351 = vmatpush1.msra.mxu0 0.0
      %1352 = vmatprep.subr.mxu0 %v1309
      %1353 = vmatpush1.msra.mxu0 %v1308
      %1354 = vmatprep.subr.mxu0 %v1307
      %1355 = vmatpush1.msra.mxu0 %v1306
      %1356 = vmatprep.subr.mxu0 %v1305
      %1357 = vmatpush1.msra.mxu0 %v1304
      %1358 = vmatprep.subr.mxu0 %v1303
      %1359 = vmatpush1.msra.mxu0 %v1302
      %1360 = vmatprep.subr.mxu0 %v1301
      %1361 = vmatpush1.msra.mxu0 %v1300
      %1362 = vmatprep.subr.mxu0 0.0
      %1363 = vmatpush2.msra.mxu0 0.0
      %1364 = vmatprep.subr.mxu0 0.0
      %1365 = vmatpush2.msra.mxu0 0.0
      %1366 = vmatprep.subr.mxu0 0.0
      %1367 = vmatpush2.msra.mxu0 0.0
      %1368 = vmatprep.subr.mxu0 0.0
      %1369 = vmatpush2.msra.mxu0 0.0
      %1370 = vmatprep.subr.mxu0 0.0
      %1371 = vmatpush2.msra.mxu0 0.0
      %1372 = vmatprep.subr.mxu0 0.0
      %1373 = vmatpush2.msra.mxu0 0.0
      %1374 = vmatprep.subr.mxu0 0.0
      %1375 = vmatpush2.msra.mxu0 0.0
      %1376 = vmatprep.subr.mxu0 0.0
      %1377 = vmatpush2.msra.mxu0 0.0
      %1378 = vmatprep.subr.mxu0 0.0
      %1379 = vmatpush2.msra.mxu0 0.0
      %1380 = vmatprep.subr.mxu0 0.0
      %1381 = vmatpush2.msra.mxu0 0.0
      %1382 = vmatprep.subr.mxu0 0.0
      %1383 = vmatpush2.msra.mxu0 0.0
      %1384 = vmatprep.subr.mxu0 0.0
      %1385 = vmatpush2.msra.mxu0 0.0
      %1386 = vmatprep.subr.mxu0 0.0
      %1387 = vmatpush2.msra.mxu0 0.0
      %1388 = vmatprep.subr.mxu0 0.0
      %1389 = vmatpush2.msra.mxu0 0.0
      %1390 = vmatprep.subr.mxu0 0.0
      %1391 = vmatpush2.msra.mxu0 0.0
      %1392 = vmatprep.subr.mxu0 0.0
      %1393 = vmatpush2.msra.mxu0 0.0
      %1394 = vmatprep.mubr.f32.mxu0 0.0
      %1395 = vmatmul.mubr.f32.gmra.mxu0 %v1322
      %v1396 = vpop.f32.mrf.mxu0
      %v1397 = vadd.f32 %v1255, %v1396
      %v1398 = vpop.f32.mrf.mxu0
      %v1399 = vadd.f32 %v1255, %v1398
      %1400 = vmatprep.mubr.f32.mxu0 0.0
      %1401 = vmatmul.mubr.f32.gmra.mxu0 %v1325
      %v1402 = vpop.f32.mrf.mxu0
      %v1403 = vadd.f32 %v1260, %v1402
      %v1404 = vpop.f32.mrf.mxu0
      %v1405 = vadd.f32 %v1260, %v1404
      %1406 = vmatprep.mubr.f32.mxu0 0.0
      %1407 = vmatmul.mubr.f32.gmra.mxu0 %v1328
      %v1408 = vpop.f32.mrf.mxu0
      %v1409 = vadd.f32 %v1265, %v1408
      %v1410 = vpop.f32.mrf.mxu0
      %v1411 = vadd.f32 %v1265, %v1410
      %1412 = vdwg.mxu0
      %1413 = vst [vmem:[%s371] sm:$0xff] %v1397
      %1414 = vst [vmem:[%s371 + $0x8] sm:$0xff] %v1399
      %1415 = vst [vmem:[%s371 + $0x10] sm:$0xff] %v1403
      %1416 = vst [vmem:[%s371 + $0x18] sm:$0xff] %v1405
      %1417 = vst [vmem:[%s371 + $0x20] sm:$0xf] %v1409
      %1418 = vst [vmem:[%s371 + $0x28] sm:$0xf] %v1411
      %s1419 = smul.u32 2, %s26
      %p1420 = scmp.lt.s32.totalorder %s25, 1
      %s1421 = scalar_select %p1420, %s25, 1
      %p1422 = scmp.lt.s32.totalorder %s1419, 1
      %s1423 = scalar_select %p1422, %s1419, 1
      %s1424 = smul.addr %s1421, 6
      %s1425 = sadd.s32 %s1423, %s1424
      %s1426 = smul.addr %s1425, 8
      %s1427 = scalar_lea.vmem %s10, %s1426
      // Predicated region
      $region65: #{mlp_forward.1} parent=55 // pred_check
        %p1428 = pneg %p249
      $region66: #{mlp_forward.1} parent=55 // pred_check_branch
        %1430 = sbr.rel (%p1428) target = $region68
      $region67: #{mlp_forward.1} parent=55 // pred_region
        %s1431 = smul.u32 2, %s26
      $region68: #{mlp_forward.1} parent=55 // pred_fallthru
        _
    $region56: #{mlp_forward.1} parent=5 // pred_fallthru
      _
    %p1432 = scmp.le.s32.totalorder 2, %s16
    // Predicated region
    $region69: #{mlp_forward.1} parent=5 // pred_check
      %p1433 = pneg %p1432
    $region70: #{mlp_forward.1} parent=5 // pred_check_branch
      %1435 = sbr.rel (%p1433) target = $region72
    $region71: #{mlp_forward.1} parent=5 // pred_region
      %s1436 = ssub.s32 %s16, 2
      // Predicated region
      $region73: #{mlp_forward.1} parent=71 // pred_check
        %p1437 = pneg %p255
      $region74: #{mlp_forward.1} parent=71 // pred_check_branch
        %1439 = sbr.rel (%p1437) target = $region76
      $region75: #{mlp_forward.1} parent=71 // pred_region
        %s1440 = smul.u32 2, %s28
        %p1441 = scmp.lt.s32.totalorder %s27, 1
        %s1442 = scalar_select %p1441, %s27, 1
        %p1443 = scmp.lt.s32.totalorder %s1440, 1
        %s1444 = scalar_select %p1443, %s1440, 1
        %s1445 = smul.addr %s1442, 6
        %s1446 = sadd.s32 %s1444, %s1445
        %s1447 = smul.addr %s1446, 8
        %s1448 = scalar_lea.vmem %s10, %s1447
      $region76: #{mlp_forward.1} parent=71 // pred_fallthru
        _
    $region72: #{mlp_forward.1} parent=5 // pred_fallthru
      _
  $region6: #{mlp_forward.1} parent=0 // loop_footer
    %s20 = sadd.s32 1, %s16
  $region7: #{mlp_forward.1} parent=0 // loop_footer_branch
    %15 = sbr.rel target = $region3
  $region8: #{mlp_forward.1} parent=0 // loop_exit
    _
  %1449 = vsyncmov [#allocation6]
  %s1450 = vpop.sfrf %1449
  %p1451 = scmp.eq.s32.totalorder %s1450, 0
  %p1452 = pneg %p1451
  %1454 = shalt.err (%p1452)
  %s1455 = scalar_lea.sflag [#allocation6], 1
  %1456 = vsyncmov %s1455
  %s1457 = vpop.sfrf %1456
  %p1458 = scmp.eq.s32.totalorder %s1457, 0
  %p1459 = pneg %p1458
  %1461 = shalt.err (%p1459)

</llo_original>
